<compile_context>
chip_gen: v5e
topology: v5e:2x2
jax: 0.10.0
libtpu: 0.0.40
codegen_flags: <defaults>
</compile_context>

<pallas_src>
import math
import jax
import jax.numpy as jnp
from jax.experimental import pallas as pl
from jax.experimental.pallas import tpu as pltpu

# ---------------- small config (consistent with V1ModelArgs, scaled down) ----
DIM = 32
N_LAYERS = 2
N_HEADS = 4
HEAD_DIM = DIM // N_HEADS
VOCAB = 16
HIDDEN = 4 * DIM
NORM_EPS = 1e-5
THETA = 10000.0
BATCH = 2
SEQ = 8
VOCAB_PAD = 128          # lane-dense logits slab, sliced to VOCAB in the wrapper


# ---------------- in-kernel helpers ------------------------------------------
def _rmsnorm(x, w, eps):
    ms = jnp.mean(x * x, axis=-1, keepdims=True)
    return x * jax.lax.rsqrt(ms + eps) * w


def _dot(a, b):
    return jnp.dot(a, b, preferred_element_type=jnp.float32)


def _dot_rhs_t(a, b):
    # a @ b.T without explicit transpose (contract last dims)
    return jax.lax.dot_general(a, b, (((1,), (1,)), ((), ())),
                               preferred_element_type=jnp.float32)


# ---------------- fully fused forward kernel ----------------------------------
def _fwd_kernel(tok_ref, embw_ref, embb_ref, cos_ref, sin_ref, mask_ref,
                ln1_ref, wqkv_ref, bqkv_ref, wo_ref, bo_ref,
                ln2_ref, w13_ref, b13_ref, w2_ref, b2_ref,
                fnorm_ref, outw_ref, outb_ref, o_ref):
    # token embedding: (T, V)bf16 @ (V, D)bf16 -> (T, D)f32
    h = _dot(tok_ref[...], embw_ref[...]) + embb_ref[...]

    cos_t = cos_ref[...]                 # (T, D)  cos repeated per pair
    sin_t = sin_ref[...]                 # (T, D)  sign-folded sin per pair
    mask = mask_ref[...]                 # (T, T)  block-diag causal, f32
    scale = 1.0 / math.sqrt(HEAD_DIM)

    for l in range(N_LAYERS):            # unrolled layer loop, h stays in VMEM
        # ---- attention -------------------------------------------------------
        a = _rmsnorm(h, ln1_ref[l], NORM_EPS).astype(jnp.bfloat16)
        # fused projection: [q | k | q_swapped | k_swapped | v]  (T, 5D) f32
        qkv = _dot(a, wqkv_ref[l]) + bqkv_ref[l]
        q = qkv[:, 0 * DIM:1 * DIM]
        k = qkv[:, 1 * DIM:2 * DIM]
        qs = qkv[:, 2 * DIM:3 * DIM]
        ks = qkv[:, 3 * DIM:4 * DIM]
        v = qkv[:, 4 * DIM:5 * DIM].astype(jnp.bfloat16)

        # RoPE, pure elementwise (pair-swap already folded into the weights)
        q = (q * cos_t + qs * sin_t).astype(jnp.bfloat16)
        k = (k * cos_t + ks * sin_t).astype(jnp.bfloat16)

        ctx = []
        for hh in range(N_HEADS):        # static lane slices per head
            sl = slice(hh * HEAD_DIM, (hh + 1) * HEAD_DIM)
            sc = _dot_rhs_t(q[:, sl], k[:, sl]) * scale + mask      # (T, T) f32
            sc = sc - jnp.max(sc, axis=-1, keepdims=True)
            p = jnp.exp(sc)
            p = p / jnp.sum(p, axis=-1, keepdims=True)
            ctx.append(_dot(p.astype(jnp.bfloat16), v[:, sl]))      # (T, Hd)
        attn = jnp.concatenate(ctx, axis=-1).astype(jnp.bfloat16)   # (T, D)
        h = h + _dot(attn, wo_ref[l]) + bo_ref[l]

        # ---- feed-forward (SwiGLU), fused w1|w3 ------------------------------
        f = _rmsnorm(h, ln2_ref[l], NORM_EPS).astype(jnp.bfloat16)
        g13 = _dot(f, w13_ref[l]) + b13_ref[l]                      # (T, 2H) f32
        g = g13[:, :HIDDEN]
        u = g13[:, HIDDEN:]
        gu = (g * jax.nn.sigmoid(g) * u).astype(jnp.bfloat16)
        h = h + _dot(gu, w2_ref[l]) + b2_ref[l]

    # ---- final RMSNorm + output head (all tokens; wrapper slices last) -------
    hn = _rmsnorm(h, fnorm_ref[...], NORM_EPS).astype(jnp.bfloat16)
    o_ref[...] = _dot(hn, outw_ref[...]) + outb_ref[...]            # (T, 128)


# ---------------- parameters ---------------------------------------------------
def init_params(key):
    def linear_init(k, fan_in, fan_out):
        k1, k2 = jax.random.split(k)
        bound = 1.0 / math.sqrt(fan_in)
        w = jax.random.uniform(k1, (fan_in, fan_out), jnp.float32, -bound, bound)
        b = jax.random.uniform(k2, (1, fan_out), jnp.float32, -bound, bound)
        return w, b

    keys = jax.random.split(key, 2 + N_LAYERS)
    params = {}
    params["emb_w"], params["emb_b"] = linear_init(keys[0], VOCAB, DIM)
    params["out_w"], params["out_b"] = linear_init(keys[1], DIM, VOCAB)
    params["final_norm_w"] = jnp.ones((1, DIM), jnp.float32)

    layers = []
    for i in range(N_LAYERS):
        lk = jax.random.split(keys[2 + i], 7)
        layer = {}
        layer["wq"], layer["bq"] = linear_init(lk[0], DIM, DIM)
        layer["wk"], layer["bk"] = linear_init(lk[1], DIM, DIM)
        layer["wv"], layer["bv"] = linear_init(lk[2], DIM, DIM)
        layer["wo"], layer["bo"] = linear_init(lk[3], DIM, DIM)
        layer["w1"], layer["b1"] = linear_init(lk[4], DIM, HIDDEN)
        layer["w3"], layer["b3"] = linear_init(lk[5], DIM, HIDDEN)
        layer["w2"], layer["b2"] = linear_init(lk[6], HIDDEN, DIM)
        layer["attn_norm_w"] = jnp.ones((1, DIM), jnp.float32)
        layer["ffn_norm_w"] = jnp.ones((1, DIM), jnp.float32)
        layers.append(layer)
    params["layers"] = layers
    return params


# ---------------- wrapper-side preprocessing (layout plumbing, no compute) -----
def _prepare_inputs(token, params):
    b, s, v = token.shape
    t = b * s
    d = DIM

    tok = token.reshape(t, v).astype(jnp.bfloat16)
    emb_w = params["emb_w"].astype(jnp.bfloat16)
    emb_b = params["emb_b"]

    # RoPE tables over the full model dim (see TODO at top of file).
    freqs = 1.0 / THETA ** (jnp.arange(0, d, 2, dtype=jnp.float32) / d)
    ang = jnp.outer(jnp.arange(s, dtype=jnp.float32), freqs)        # (S, D/2)
    cos_t = jnp.tile(jnp.repeat(jnp.cos(ang), 2, axis=1), (b, 1))   # (T, D)
    sin = jnp.sin(ang)
    sin_t = jnp.tile(jnp.stack([-sin, sin], axis=-1).reshape(s, d), (b, 1))

    # Block-diagonal causal mask over the flattened batch*seq token axis:
    # exactly per-batch causal attention once softmax-ed.
    rows = jnp.arange(t)
    bi, si = rows // s, rows % s
    allowed = (bi[:, None] == bi[None, :]) & (si[None, :] <= si[:, None])
    mask = jnp.where(allowed, 0.0, float("-inf")).astype(jnp.float32)

    # Pair-swap (2i <-> 2i+1) column permutation folded into the Q/K weights,
    # so RoPE needs no in-kernel shuffle or permutation matmul.
    idx = jnp.arange(d)
    swap = idx + 1 - 2 * (idx % 2)

    layers = params["layers"]

    def stack(fn, dtype):
        return jnp.stack([fn(ly) for ly in layers], axis=0).astype(dtype)

    ln1 = stack(lambda ly: ly["attn_norm_w"], jnp.float32)
    wqkv = stack(lambda ly: jnp.concatenate(
        [ly["wq"], ly["wk"], ly["wq"][:, swap], ly["wk"][:, swap], ly["wv"]],
        axis=1), jnp.bfloat16)                                      # (L, D, 5D)
    bqkv = stack(lambda ly: jnp.concatenate(
        [ly["bq"], ly["bk"], ly["bq"][:, swap], ly["bk"][:, swap], ly["bv"]],
        axis=1), jnp.float32)                                       # (L, 1, 5D)
    wo = stack(lambda ly: ly["wo"], jnp.bfloat16)
    bo = stack(lambda ly: ly["bo"], jnp.float32)
    ln2 = stack(lambda ly: ly["ffn_norm_w"], jnp.float32)
    w13 = stack(lambda ly: jnp.concatenate([ly["w1"], ly["w3"]], axis=1),
                jnp.bfloat16)                                       # (L, D, 2H)
    b13 = stack(lambda ly: jnp.concatenate([ly["b1"], ly["b3"]], axis=1),
                jnp.float32)
    w2 = stack(lambda ly: ly["w2"], jnp.bfloat16)
    b2 = stack(lambda ly: ly["b2"], jnp.float32)

    fnorm = params["final_norm_w"]
    # pad the output head to 128 lanes so the final matmul + store are lane-dense
    outw = jnp.zeros((d, VOCAB_PAD), jnp.float32).at[:, :VOCAB].set(
        params["out_w"]).astype(jnp.bfloat16)
    outb = jnp.zeros((1, VOCAB_PAD), jnp.float32).at[:, :VOCAB].set(
        params["out_b"])

    return (tok, emb_w, emb_b, cos_t, sin_t, mask,
            ln1, wqkv, bqkv, wo, bo, ln2, w13, b13, w2, b2,
            fnorm, outw, outb)


def transformer_forward(token, params):
    b, s, _ = token.shape
    t = b * s
    inputs = _prepare_inputs(token, params)
    vmem_spec = pl.BlockSpec(memory_space=pltpu.MemorySpace.VMEM)
    out_full = pl.pallas_call(
        _fwd_kernel,
        out_shape=jax.ShapeDtypeStruct((t, VOCAB_PAD), jnp.float32),
        in_specs=[vmem_spec] * len(inputs),
        out_specs=vmem_spec,
    )(*inputs)
    # module semantics: logits of the last token only, true vocab width
    return out_full.reshape(b, s, VOCAB_PAD)[:, -1, :VOCAB]


# ---------------- pure-JAX f32 reference (same semantics) ----------------------
def reference_forward(token, params):
    def rms(x, w):
        ms = jnp.mean(x * x, axis=-1, keepdims=True)
        return x * jax.lax.rsqrt(ms + NORM_EPS) * w

    b, s, v = token.shape
    h = token @ params["emb_w"] + params["emb_b"]
    freqs = 1.0 / THETA ** (jnp.arange(0, DIM, 2, dtype=jnp.float32) / DIM)
    ang = jnp.outer(jnp.arange(s, dtype=jnp.float32), freqs)
    cos, sin = jnp.cos(ang), jnp.sin(ang)
    mask = jnp.triu(jnp.full((s, s), float("-inf"), jnp.float32), k=1)

    def rope(x):
        xr = x.reshape(b, s, DIM // 2, 2)
        xe, xo = xr[..., 0], xr[..., 1]
        re = xe * cos - xo * sin
        ro = xe * sin + xo * cos
        return jnp.stack([re, ro], axis=-1).reshape(b, s, DIM)

    for layer in params["layers"]:
        a = rms(h, layer["attn_norm_w"])
        q = a @ layer["wq"] + layer["bq"]
        k = a @ layer["wk"] + layer["bk"]
        vv = a @ layer["wv"] + layer["bv"]
        q, k = rope(q), rope(k)
        qh = q.reshape(b, s, N_HEADS, HEAD_DIM).transpose(0, 2, 1, 3)
        kh = k.reshape(b, s, N_HEADS, HEAD_DIM).transpose(0, 2, 1, 3)
        vh = vv.reshape(b, s, N_HEADS, HEAD_DIM).transpose(0, 2, 1, 3)
        sc = jnp.einsum("bhqd,bhkd->bhqk", qh, kh) / math.sqrt(HEAD_DIM) + mask
        p = jax.nn.softmax(sc, axis=-1)
        o = jnp.einsum("bhqk,bhkd->bhqd", p, vh).transpose(0, 2, 1, 3)
        o = o.reshape(b, s, DIM)
        h = h + (o @ layer["wo"] + layer["bo"])
        f = rms(h, layer["ffn_norm_w"])
        g = f @ layer["w1"] + layer["b1"]
        g = g * jax.nn.sigmoid(g)
        u = f @ layer["w3"] + layer["b3"]
        h = h + ((g * u) @ layer["w2"] + layer["b2"])

    hn = rms(h, params["final_norm_w"])
    return hn[:, -1, :] @ params["out_w"] + params["out_b"]


# ---------------- main ----------------------------------------------------------
if __name__ == "__main__":
    key = jax.random.PRNGKey(0)
    k_params, k_tok = jax.random.split(key)

    params = init_params(k_params)
    tok_ids = jax.random.randint(k_tok, (BATCH, SEQ), 0, VOCAB)
    token = jax.nn.one_hot(tok_ids, VOCAB, dtype=jnp.float32)   # (B, S, V)

    out = transformer_forward(token, params)
    out = jax.block_until_ready(out)

    ref = jax.block_until_ready(reference_forward(token, params))
    max_diff = float(jnp.max(jnp.abs(out - ref)))
    assert out.shape == (BATCH, VOCAB) and out.dtype == jnp.float32
    assert bool(jnp.all(jnp.isfinite(out)))
    # bf16 MXU operands vs. f32 reference -> small numeric drift is expected
    assert max_diff < 3e-2, f"mismatch vs reference: {max_diff}"

    print("KERNEL_OK")
</pallas_src>

<mosaic_0001>
module attributes {stable_mosaic.version = 11 : i64} {
  func.func @_fwd_kernel(%arg0: memref<16x16xbf16, #tpu.memory_space<vmem>>, %arg1: memref<16x32xbf16, #tpu.memory_space<vmem>>, %arg2: memref<1x32xf32, #tpu.memory_space<vmem>>, %arg3: memref<16x32xf32, #tpu.memory_space<vmem>>, %arg4: memref<16x32xf32, #tpu.memory_space<vmem>>, %arg5: memref<16x16xf32, #tpu.memory_space<vmem>>, %arg6: memref<2x1x32xf32, #tpu.memory_space<vmem>>, %arg7: memref<2x32x160xbf16, #tpu.memory_space<vmem>>, %arg8: memref<2x1x160xf32, #tpu.memory_space<vmem>>, %arg9: memref<2x32x32xbf16, #tpu.memory_space<vmem>>, %arg10: memref<2x1x32xf32, #tpu.memory_space<vmem>>, %arg11: memref<2x1x32xf32, #tpu.memory_space<vmem>>, %arg12: memref<2x32x256xbf16, #tpu.memory_space<vmem>>, %arg13: memref<2x1x256xf32, #tpu.memory_space<vmem>>, %arg14: memref<2x128x32xbf16, #tpu.memory_space<vmem>>, %arg15: memref<2x1x32xf32, #tpu.memory_space<vmem>>, %arg16: memref<1x32xf32, #tpu.memory_space<vmem>>, %arg17: memref<32x128xbf16, #tpu.memory_space<vmem>>, %arg18: memref<1x128xf32, #tpu.memory_space<vmem>>, %arg19: memref<16x128xf32, #tpu.memory_space<vmem>>) attributes {dimension_semantics = [], scalar_prefetch = 0 : i64, scratch_operands = 0 : i64, tpu.core_type = #tpu.core_type<tc>} {
    %c0 = arith.constant 0 : index
    %c0_0 = arith.constant 0 : index
    %0 = vector.load %arg0[%c0, %c0_0] : memref<16x16xbf16, #tpu.memory_space<vmem>>, vector<16x16xbf16>
    %c0_1 = arith.constant 0 : index
    %c0_2 = arith.constant 0 : index
    %1 = vector.load %arg1[%c0_1, %c0_2] : memref<16x32xbf16, #tpu.memory_space<vmem>>, vector<16x32xbf16>
    %cst = arith.constant dense<0.000000e+00> : vector<16x32xf32>
    %2 = tpu.matmul %0, %1, %cst {dimension_numbers = #tpu.dot_dimension_numbers<[1], [0], [0], [1], [0, 0, 1, 1], [], []>} : vector<16x16xbf16>, vector<16x32xbf16>, vector<16x32xf32> -> vector<16x32xf32>
    %c0_3 = arith.constant 0 : index
    %c0_4 = arith.constant 0 : index
    %3 = vector.load %arg2[%c0_3, %c0_4] : memref<1x32xf32, #tpu.memory_space<vmem>>, vector<1x32xf32>
    %4 = vector.broadcast %3 : vector<1x32xf32> to vector<16x32xf32>
    %5 = arith.addf %2, %4 : vector<16x32xf32>
    %c0_5 = arith.constant 0 : index
    %c0_6 = arith.constant 0 : index
    %6 = vector.load %arg3[%c0_5, %c0_6] : memref<16x32xf32, #tpu.memory_space<vmem>>, vector<16x32xf32>
    %c0_7 = arith.constant 0 : index
    %c0_8 = arith.constant 0 : index
    %7 = vector.load %arg4[%c0_7, %c0_8] : memref<16x32xf32, #tpu.memory_space<vmem>>, vector<16x32xf32>
    %c0_9 = arith.constant 0 : index
    %c0_10 = arith.constant 0 : index
    %8 = vector.load %arg5[%c0_9, %c0_10] : memref<16x16xf32, #tpu.memory_space<vmem>>, vector<16x16xf32>
    %c0_11 = arith.constant 0 : index
    %c0_12 = arith.constant 0 : index
    %c0_13 = arith.constant 0 : index
    %9 = vector.load %arg6[%c0_11, %c0_12, %c0_13] : memref<2x1x32xf32, #tpu.memory_space<vmem>>, vector<1x1x32xf32>
    %10 = vector.shape_cast %9 : vector<1x1x32xf32> to vector<1x32xf32>
    %11 = arith.mulf %5, %5 : vector<16x32xf32>
    %cst_14 = arith.constant dense<0.000000e+00> : vector<16xf32>
    %12 = vector.multi_reduction <add>, %11, %cst_14 [1] : vector<16x32xf32> to vector<16xf32>
    %13 = vector.shape_cast %12 : vector<16xf32> to vector<16x1xf32>
    %cst_15 = arith.constant 3.200000e+01 : f32
    %14 = vector.broadcast %cst_15 : f32 to vector<16x1xf32>
    %15 = arith.divf %13, %14 : vector<16x1xf32>
    %cst_16 = arith.constant 9.99999974E-6 : f32
    %16 = vector.broadcast %cst_16 : f32 to vector<16x1xf32>
    %17 = arith.addf %15, %16 : vector<16x1xf32>
    %18 = math.rsqrt %17 : vector<16x1xf32>
    %19 = vector.broadcast %18 : vector<16x1xf32> to vector<16x32xf32>
    %20 = arith.mulf %5, %19 : vector<16x32xf32>
    %21 = vector.broadcast %10 : vector<1x32xf32> to vector<16x32xf32>
    %22 = arith.mulf %20, %21 : vector<16x32xf32>
    %23 = arith.truncf %22 : vector<16x32xf32> to vector<16x32xbf16>
    %c0_17 = arith.constant 0 : index
    %c0_18 = arith.constant 0 : index
    %c0_19 = arith.constant 0 : index
    %24 = vector.load %arg7[%c0_17, %c0_18, %c0_19] : memref<2x32x160xbf16, #tpu.memory_space<vmem>>, vector<1x32x160xbf16>
    %25 = vector.shape_cast %24 : vector<1x32x160xbf16> to vector<32x160xbf16>
    %cst_20 = arith.constant dense<0.000000e+00> : vector<16x160xf32>
    %26 = tpu.matmul %23, %25, %cst_20 {dimension_numbers = #tpu.dot_dimension_numbers<[1], [0], [0], [1], [0, 0, 1, 1], [], []>} : vector<16x32xbf16>, vector<32x160xbf16>, vector<16x160xf32> -> vector<16x160xf32>
    %c0_21 = arith.constant 0 : index
    %c0_22 = arith.constant 0 : index
    %c0_23 = arith.constant 0 : index
    %27 = vector.load %arg8[%c0_21, %c0_22, %c0_23] : memref<2x1x160xf32, #tpu.memory_space<vmem>>, vector<1x1x160xf32>
    %28 = vector.shape_cast %27 : vector<1x1x160xf32> to vector<1x160xf32>
    %29 = vector.broadcast %28 : vector<1x160xf32> to vector<16x160xf32>
    %30 = arith.addf %26, %29 : vector<16x160xf32>
    %31 = vector.extract_strided_slice %30 {offsets = [0, 0], sizes = [16, 32], strides = [1, 1]} : vector<16x160xf32> to vector<16x32xf32>
    %32 = vector.extract_strided_slice %30 {offsets = [0, 32], sizes = [16, 32], strides = [1, 1]} : vector<16x160xf32> to vector<16x32xf32>
    %33 = vector.extract_strided_slice %30 {offsets = [0, 64], sizes = [16, 32], strides = [1, 1]} : vector<16x160xf32> to vector<16x32xf32>
    %34 = vector.extract_strided_slice %30 {offsets = [0, 96], sizes = [16, 32], strides = [1, 1]} : vector<16x160xf32> to vector<16x32xf32>
    %35 = vector.extract_strided_slice %30 {offsets = [0, 128], sizes = [16, 32], strides = [1, 1]} : vector<16x160xf32> to vector<16x32xf32>
    %36 = arith.truncf %35 : vector<16x32xf32> to vector<16x32xbf16>
    %37 = arith.mulf %31, %6 : vector<16x32xf32>
    %38 = arith.mulf %33, %7 : vector<16x32xf32>
    %39 = arith.addf %37, %38 : vector<16x32xf32>
    %40 = arith.truncf %39 : vector<16x32xf32> to vector<16x32xbf16>
    %41 = arith.mulf %32, %6 : vector<16x32xf32>
    %42 = arith.mulf %34, %7 : vector<16x32xf32>
    %43 = arith.addf %41, %42 : vector<16x32xf32>
    %44 = arith.truncf %43 : vector<16x32xf32> to vector<16x32xbf16>
    %45 = vector.extract_strided_slice %40 {offsets = [0, 0], sizes = [16, 8], strides = [1, 1]} : vector<16x32xbf16> to vector<16x8xbf16>
    %46 = vector.extract_strided_slice %44 {offsets = [0, 0], sizes = [16, 8], strides = [1, 1]} : vector<16x32xbf16> to vector<16x8xbf16>
    %cst_24 = arith.constant dense<0.000000e+00> : vector<16x16xf32>
    %47 = tpu.matmul %45, %46, %cst_24 {dimension_numbers = #tpu.dot_dimension_numbers<[1], [1], [0], [0], [0, 0, 1, 0], [], []>} : vector<16x8xbf16>, vector<16x8xbf16>, vector<16x16xf32> -> vector<16x16xf32>
    %cst_25 = arith.constant 0.353553385 : f32
    %48 = vector.broadcast %cst_25 : f32 to vector<16x16xf32>
    %49 = arith.mulf %47, %48 : vector<16x16xf32>
    %50 = arith.addf %49, %8 : vector<16x16xf32>
    %cst_26 = arith.constant dense<0xFF800000> : vector<16xf32>
    %51 = vector.multi_reduction <maximumf>, %50, %cst_26 [1] : vector<16x16xf32> to vector<16xf32>
    %52 = vector.shape_cast %51 : vector<16xf32> to vector<16x1xf32>
    %53 = vector.broadcast %52 : vector<16x1xf32> to vector<16x16xf32>
    %54 = arith.subf %50, %53 : vector<16x16xf32>
    %55 = math.exp %54 : vector<16x16xf32>
    %cst_27 = arith.constant dense<0.000000e+00> : vector<16xf32>
    %56 = vector.multi_reduction <add>, %55, %cst_27 [1] : vector<16x16xf32> to vector<16xf32>
    %57 = vector.shape_cast %56 : vector<16xf32> to vector<16x1xf32>
    %58 = vector.broadcast %57 : vector<16x1xf32> to vector<16x16xf32>
    %59 = arith.divf %55, %58 : vector<16x16xf32>
    %60 = arith.truncf %59 : vector<16x16xf32> to vector<16x16xbf16>
    %61 = vector.extract_strided_slice %36 {offsets = [0, 0], sizes = [16, 8], strides = [1, 1]} : vector<16x32xbf16> to vector<16x8xbf16>
    %cst_28 = arith.constant dense<0.000000e+00> : vector<16x8xf32>
    %62 = tpu.matmul %60, %61, %cst_28 {dimension_numbers = #tpu.dot_dimension_numbers<[1], [0], [0], [1], [0, 0, 1, 1], [], []>} : vector<16x16xbf16>, vector<16x8xbf16>, vector<16x8xf32> -> vector<16x8xf32>
    %63 = vector.extract_strided_slice %40 {offsets = [0, 8], sizes = [16, 8], strides = [1, 1]} : vector<16x32xbf16> to vector<16x8xbf16>
    %64 = vector.extract_strided_slice %44 {offsets = [0, 8], sizes = [16, 8], strides = [1, 1]} : vector<16x32xbf16> to vector<16x8xbf16>
    %cst_29 = arith.constant dense<0.000000e+00> : vector<16x16xf32>
    %65 = tpu.matmul %63, %64, %cst_29 {dimension_numbers = #tpu.dot_dimension_numbers<[1], [1], [0], [0], [0, 0, 1, 0], [], []>} : vector<16x8xbf16>, vector<16x8xbf16>, vector<16x16xf32> -> vector<16x16xf32>
    %cst_30 = arith.constant 0.353553385 : f32
    %66 = vector.broadcast %cst_30 : f32 to vector<16x16xf32>
    %67 = arith.mulf %65, %66 : vector<16x16xf32>
    %68 = arith.addf %67, %8 : vector<16x16xf32>
    %cst_31 = arith.constant dense<0xFF800000> : vector<16xf32>
    %69 = vector.multi_reduction <maximumf>, %68, %cst_31 [1] : vector<16x16xf32> to vector<16xf32>
    %70 = vector.shape_cast %69 : vector<16xf32> to vector<16x1xf32>
    %71 = vector.broadcast %70 : vector<16x1xf32> to vector<16x16xf32>
    %72 = arith.subf %68, %71 : vector<16x16xf32>
    %73 = math.exp %72 : vector<16x16xf32>
    %cst_32 = arith.constant dense<0.000000e+00> : vector<16xf32>
    %74 = vector.multi_reduction <add>, %73, %cst_32 [1] : vector<16x16xf32> to vector<16xf32>
    %75 = vector.shape_cast %74 : vector<16xf32> to vector<16x1xf32>
    %76 = vector.broadcast %75 : vector<16x1xf32> to vector<16x16xf32>
    %77 = arith.divf %73, %76 : vector<16x16xf32>
    %78 = arith.truncf %77 : vector<16x16xf32> to vector<16x16xbf16>
    %79 = vector.extract_strided_slice %36 {offsets = [0, 8], sizes = [16, 8], strides = [1, 1]} : vector<16x32xbf16> to vector<16x8xbf16>
    %cst_33 = arith.constant dense<0.000000e+00> : vector<16x8xf32>
    %80 = tpu.matmul %78, %79, %cst_33 {dimension_numbers = #tpu.dot_dimension_numbers<[1], [0], [0], [1], [0, 0, 1, 1], [], []>} : vector<16x16xbf16>, vector<16x8xbf16>, vector<16x8xf32> -> vector<16x8xf32>
    %81 = vector.extract_strided_slice %40 {offsets = [0, 16], sizes = [16, 8], strides = [1, 1]} : vector<16x32xbf16> to vector<16x8xbf16>
    %82 = vector.extract_strided_slice %44 {offsets = [0, 16], sizes = [16, 8], strides = [1, 1]} : vector<16x32xbf16> to vector<16x8xbf16>
    %cst_34 = arith.constant dense<0.000000e+00> : vector<16x16xf32>
    %83 = tpu.matmul %81, %82, %cst_34 {dimension_numbers = #tpu.dot_dimension_numbers<[1], [1], [0], [0], [0, 0, 1, 0], [], []>} : vector<16x8xbf16>, vector<16x8xbf16>, vector<16x16xf32> -> vector<16x16xf32>
    %cst_35 = arith.constant 0.353553385 : f32
    %84 = vector.broadcast %cst_35 : f32 to vector<16x16xf32>
    %85 = arith.mulf %83, %84 : vector<16x16xf32>
    %86 = arith.addf %85, %8 : vector<16x16xf32>
    %cst_36 = arith.constant dense<0xFF800000> : vector<16xf32>
    %87 = vector.multi_reduction <maximumf>, %86, %cst_36 [1] : vector<16x16xf32> to vector<16xf32>
    %88 = vector.shape_cast %87 : vector<16xf32> to vector<16x1xf32>
    %89 = vector.broadcast %88 : vector<16x1xf32> to vector<16x16xf32>
    %90 = arith.subf %86, %89 : vector<16x16xf32>
    %91 = math.exp %90 : vector<16x16xf32>
    %cst_37 = arith.constant dense<0.000000e+00> : vector<16xf32>
    %92 = vector.multi_reduction <add>, %91, %cst_37 [1] : vector<16x16xf32> to vector<16xf32>
    %93 = vector.shape_cast %92 : vector<16xf32> to vector<16x1xf32>
    %94 = vector.broadcast %93 : vector<16x1xf32> to vector<16x16xf32>
    %95 = arith.divf %91, %94 : vector<16x16xf32>
    %96 = arith.truncf %95 : vector<16x16xf32> to vector<16x16xbf16>
    %97 = vector.extract_strided_slice %36 {offsets = [0, 16], sizes = [16, 8], strides = [1, 1]} : vector<16x32xbf16> to vector<16x8xbf16>
    %cst_38 = arith.constant dense<0.000000e+00> : vector<16x8xf32>
    %98 = tpu.matmul %96, %97, %cst_38 {dimension_numbers = #tpu.dot_dimension_numbers<[1], [0], [0], [1], [0, 0, 1, 1], [], []>} : vector<16x16xbf16>, vector<16x8xbf16>, vector<16x8xf32> -> vector<16x8xf32>
    %99 = vector.extract_strided_slice %40 {offsets = [0, 24], sizes = [16, 8], strides = [1, 1]} : vector<16x32xbf16> to vector<16x8xbf16>
    %100 = vector.extract_strided_slice %44 {offsets = [0, 24], sizes = [16, 8], strides = [1, 1]} : vector<16x32xbf16> to vector<16x8xbf16>
    %cst_39 = arith.constant dense<0.000000e+00> : vector<16x16xf32>
    %101 = tpu.matmul %99, %100, %cst_39 {dimension_numbers = #tpu.dot_dimension_numbers<[1], [1], [0], [0], [0, 0, 1, 0], [], []>} : vector<16x8xbf16>, vector<16x8xbf16>, vector<16x16xf32> -> vector<16x16xf32>
    %cst_40 = arith.constant 0.353553385 : f32
    %102 = vector.broadcast %cst_40 : f32 to vector<16x16xf32>
    %103 = arith.mulf %101, %102 : vector<16x16xf32>
    %104 = arith.addf %103, %8 : vector<16x16xf32>
    %cst_41 = arith.constant dense<0xFF800000> : vector<16xf32>
    %105 = vector.multi_reduction <maximumf>, %104, %cst_41 [1] : vector<16x16xf32> to vector<16xf32>
    %106 = vector.shape_cast %105 : vector<16xf32> to vector<16x1xf32>
    %107 = vector.broadcast %106 : vector<16x1xf32> to vector<16x16xf32>
    %108 = arith.subf %104, %107 : vector<16x16xf32>
    %109 = math.exp %108 : vector<16x16xf32>
    %cst_42 = arith.constant dense<0.000000e+00> : vector<16xf32>
    %110 = vector.multi_reduction <add>, %109, %cst_42 [1] : vector<16x16xf32> to vector<16xf32>
    %111 = vector.shape_cast %110 : vector<16xf32> to vector<16x1xf32>
    %112 = vector.broadcast %111 : vector<16x1xf32> to vector<16x16xf32>
    %113 = arith.divf %109, %112 : vector<16x16xf32>
    %114 = arith.truncf %113 : vector<16x16xf32> to vector<16x16xbf16>
    %115 = vector.extract_strided_slice %36 {offsets = [0, 24], sizes = [16, 8], strides = [1, 1]} : vector<16x32xbf16> to vector<16x8xbf16>
    %cst_43 = arith.constant dense<0.000000e+00> : vector<16x8xf32>
    %116 = tpu.matmul %114, %115, %cst_43 {dimension_numbers = #tpu.dot_dimension_numbers<[1], [0], [0], [1], [0, 0, 1, 1], [], []>} : vector<16x16xbf16>, vector<16x8xbf16>, vector<16x8xf32> -> vector<16x8xf32>
    %117 = tpu.concatenate %62, %80, %98, %116 in 1 : vector<16x8xf32>, vector<16x8xf32>, vector<16x8xf32>, vector<16x8xf32> -> vector<16x32xf32>
    %118 = arith.truncf %117 : vector<16x32xf32> to vector<16x32xbf16>
    %c0_44 = arith.constant 0 : index
    %c0_45 = arith.constant 0 : index
    %c0_46 = arith.constant 0 : index
    %119 = vector.load %arg9[%c0_44, %c0_45, %c0_46] : memref<2x32x32xbf16, #tpu.memory_space<vmem>>, vector<1x32x32xbf16>
    %120 = vector.shape_cast %119 : vector<1x32x32xbf16> to vector<32x32xbf16>
    %cst_47 = arith.constant dense<0.000000e+00> : vector<16x32xf32>
    %121 = tpu.matmul %118, %120, %cst_47 {dimension_numbers = #tpu.dot_dimension_numbers<[1], [0], [0], [1], [0, 0, 1, 1], [], []>} : vector<16x32xbf16>, vector<32x32xbf16>, vector<16x32xf32> -> vector<16x32xf32>
    %122 = arith.addf %5, %121 : vector<16x32xf32>
    %c0_48 = arith.constant 0 : index
    %c0_49 = arith.constant 0 : index
    %c0_50 = arith.constant 0 : index
    %123 = vector.load %arg10[%c0_48, %c0_49, %c0_50] : memref<2x1x32xf32, #tpu.memory_space<vmem>>, vector<1x1x32xf32>
    %124 = vector.shape_cast %123 : vector<1x1x32xf32> to vector<1x32xf32>
    %125 = vector.broadcast %124 : vector<1x32xf32> to vector<16x32xf32>
    %126 = arith.addf %122, %125 : vector<16x32xf32>
    %c0_51 = arith.constant 0 : index
    %c0_52 = arith.constant 0 : index
    %c0_53 = arith.constant 0 : index
    %127 = vector.load %arg11[%c0_51, %c0_52, %c0_53] : memref<2x1x32xf32, #tpu.memory_space<vmem>>, vector<1x1x32xf32>
    %128 = vector.shape_cast %127 : vector<1x1x32xf32> to vector<1x32xf32>
    %129 = arith.mulf %126, %126 : vector<16x32xf32>
    %cst_54 = arith.constant dense<0.000000e+00> : vector<16xf32>
    %130 = vector.multi_reduction <add>, %129, %cst_54 [1] : vector<16x32xf32> to vector<16xf32>
    %131 = vector.shape_cast %130 : vector<16xf32> to vector<16x1xf32>
    %cst_55 = arith.constant 3.200000e+01 : f32
    %132 = vector.broadcast %cst_55 : f32 to vector<16x1xf32>
    %133 = arith.divf %131, %132 : vector<16x1xf32>
    %cst_56 = arith.constant 9.99999974E-6 : f32
    %134 = vector.broadcast %cst_56 : f32 to vector<16x1xf32>
    %135 = arith.addf %133, %134 : vector<16x1xf32>
    %136 = math.rsqrt %135 : vector<16x1xf32>
    %137 = vector.broadcast %136 : vector<16x1xf32> to vector<16x32xf32>
    %138 = arith.mulf %126, %137 : vector<16x32xf32>
    %139 = vector.broadcast %128 : vector<1x32xf32> to vector<16x32xf32>
    %140 = arith.mulf %138, %139 : vector<16x32xf32>
    %141 = arith.truncf %140 : vector<16x32xf32> to vector<16x32xbf16>
    %c0_57 = arith.constant 0 : index
    %c0_58 = arith.constant 0 : index
    %c0_59 = arith.constant 0 : index
    %142 = vector.load %arg12[%c0_57, %c0_58, %c0_59] : memref<2x32x256xbf16, #tpu.memory_space<vmem>>, vector<1x32x256xbf16>
    %143 = vector.shape_cast %142 : vector<1x32x256xbf16> to vector<32x256xbf16>
    %cst_60 = arith.constant dense<0.000000e+00> : vector<16x256xf32>
    %144 = tpu.matmul %141, %143, %cst_60 {dimension_numbers = #tpu.dot_dimension_numbers<[1], [0], [0], [1], [0, 0, 1, 1], [], []>} : vector<16x32xbf16>, vector<32x256xbf16>, vector<16x256xf32> -> vector<16x256xf32>
    %c0_61 = arith.constant 0 : index
    %c0_62 = arith.constant 0 : index
    %c0_63 = arith.constant 0 : index
    %145 = vector.load %arg13[%c0_61, %c0_62, %c0_63] : memref<2x1x256xf32, #tpu.memory_space<vmem>>, vector<1x1x256xf32>
    %146 = vector.shape_cast %145 : vector<1x1x256xf32> to vector<1x256xf32>
    %147 = vector.broadcast %146 : vector<1x256xf32> to vector<16x256xf32>
    %148 = arith.addf %144, %147 : vector<16x256xf32>
    %149 = vector.extract_strided_slice %148 {offsets = [0, 0], sizes = [16, 128], strides = [1, 1]} : vector<16x256xf32> to vector<16x128xf32>
    %150 = vector.extract_strided_slice %148 {offsets = [0, 128], sizes = [16, 128], strides = [1, 1]} : vector<16x256xf32> to vector<16x128xf32>
    %151 = arith.negf %149 : vector<16x128xf32>
    %152 = math.exp %151 : vector<16x128xf32>
    %cst_64 = arith.constant 1.000000e+00 : f32
    %153 = vector.broadcast %cst_64 : f32 to vector<16x128xf32>
    %154 = arith.addf %153, %152 : vector<16x128xf32>
    %155 = arith.divf %153, %154 : vector<16x128xf32>
    %156 = arith.mulf %149, %155 : vector<16x128xf32>
    %157 = arith.mulf %156, %150 : vector<16x128xf32>
    %158 = arith.truncf %157 : vector<16x128xf32> to vector<16x128xbf16>
    %c0_65 = arith.constant 0 : index
    %c0_66 = arith.constant 0 : index
    %c0_67 = arith.constant 0 : index
    %159 = vector.load %arg14[%c0_65, %c0_66, %c0_67] : memref<2x128x32xbf16, #tpu.memory_space<vmem>>, vector<1x128x32xbf16>
    %160 = vector.shape_cast %159 : vector<1x128x32xbf16> to vector<128x32xbf16>
    %cst_68 = arith.constant dense<0.000000e+00> : vector<16x32xf32>
    %161 = tpu.matmul %158, %160, %cst_68 {dimension_numbers = #tpu.dot_dimension_numbers<[1], [0], [0], [1], [0, 0, 1, 1], [], []>} : vector<16x128xbf16>, vector<128x32xbf16>, vector<16x32xf32> -> vector<16x32xf32>
    %162 = arith.addf %126, %161 : vector<16x32xf32>
    %c0_69 = arith.constant 0 : index
    %c0_70 = arith.constant 0 : index
    %c0_71 = arith.constant 0 : index
    %163 = vector.load %arg15[%c0_69, %c0_70, %c0_71] : memref<2x1x32xf32, #tpu.memory_space<vmem>>, vector<1x1x32xf32>
    %164 = vector.shape_cast %163 : vector<1x1x32xf32> to vector<1x32xf32>
    %165 = vector.broadcast %164 : vector<1x32xf32> to vector<16x32xf32>
    %166 = arith.addf %162, %165 : vector<16x32xf32>
    %c1 = arith.constant 1 : index
    %c0_72 = arith.constant 0 : index
    %c0_73 = arith.constant 0 : index
    %167 = vector.load %arg6[%c1, %c0_72, %c0_73] : memref<2x1x32xf32, #tpu.memory_space<vmem>>, vector<1x1x32xf32>
    %168 = vector.shape_cast %167 : vector<1x1x32xf32> to vector<1x32xf32>
    %169 = arith.mulf %166, %166 : vector<16x32xf32>
    %cst_74 = arith.constant dense<0.000000e+00> : vector<16xf32>
    %170 = vector.multi_reduction <add>, %169, %cst_74 [1] : vector<16x32xf32> to vector<16xf32>
    %171 = vector.shape_cast %170 : vector<16xf32> to vector<16x1xf32>
    %cst_75 = arith.constant 3.200000e+01 : f32
    %172 = vector.broadcast %cst_75 : f32 to vector<16x1xf32>
    %173 = arith.divf %171, %172 : vector<16x1xf32>
    %cst_76 = arith.constant 9.99999974E-6 : f32
    %174 = vector.broadcast %cst_76 : f32 to vector<16x1xf32>
    %175 = arith.addf %173, %174 : vector<16x1xf32>
    %176 = math.rsqrt %175 : vector<16x1xf32>
    %177 = vector.broadcast %176 : vector<16x1xf32> to vector<16x32xf32>
    %178 = arith.mulf %166, %177 : vector<16x32xf32>
    %179 = vector.broadcast %168 : vector<1x32xf32> to vector<16x32xf32>
    %180 = arith.mulf %178, %179 : vector<16x32xf32>
    %181 = arith.truncf %180 : vector<16x32xf32> to vector<16x32xbf16>
    %c1_77 = arith.constant 1 : index
    %c0_78 = arith.constant 0 : index
    %c0_79 = arith.constant 0 : index
    %182 = vector.load %arg7[%c1_77, %c0_78, %c0_79] : memref<2x32x160xbf16, #tpu.memory_space<vmem>>, vector<1x32x160xbf16>
    %183 = vector.shape_cast %182 : vector<1x32x160xbf16> to vector<32x160xbf16>
    %cst_80 = arith.constant dense<0.000000e+00> : vector<16x160xf32>
    %184 = tpu.matmul %181, %183, %cst_80 {dimension_numbers = #tpu.dot_dimension_numbers<[1], [0], [0], [1], [0, 0, 1, 1], [], []>} : vector<16x32xbf16>, vector<32x160xbf16>, vector<16x160xf32> -> vector<16x160xf32>
    %c1_81 = arith.constant 1 : index
    %c0_82 = arith.constant 0 : index
    %c0_83 = arith.constant 0 : index
    %185 = vector.load %arg8[%c1_81, %c0_82, %c0_83] : memref<2x1x160xf32, #tpu.memory_space<vmem>>, vector<1x1x160xf32>
    %186 = vector.shape_cast %185 : vector<1x1x160xf32> to vector<1x160xf32>
    %187 = vector.broadcast %186 : vector<1x160xf32> to vector<16x160xf32>
    %188 = arith.addf %184, %187 : vector<16x160xf32>
    %189 = vector.extract_strided_slice %188 {offsets = [0, 0], sizes = [16, 32], strides = [1, 1]} : vector<16x160xf32> to vector<16x32xf32>
    %190 = vector.extract_strided_slice %188 {offsets = [0, 32], sizes = [16, 32], strides = [1, 1]} : vector<16x160xf32> to vector<16x32xf32>
    %191 = vector.extract_strided_slice %188 {offsets = [0, 64], sizes = [16, 32], strides = [1, 1]} : vector<16x160xf32> to vector<16x32xf32>
    %192 = vector.extract_strided_slice %188 {offsets = [0, 96], sizes = [16, 32], strides = [1, 1]} : vector<16x160xf32> to vector<16x32xf32>
    %193 = vector.extract_strided_slice %188 {offsets = [0, 128], sizes = [16, 32], strides = [1, 1]} : vector<16x160xf32> to vector<16x32xf32>
    %194 = arith.truncf %193 : vector<16x32xf32> to vector<16x32xbf16>
    %195 = arith.mulf %189, %6 : vector<16x32xf32>
    %196 = arith.mulf %191, %7 : vector<16x32xf32>
    %197 = arith.addf %195, %196 : vector<16x32xf32>
    %198 = arith.truncf %197 : vector<16x32xf32> to vector<16x32xbf16>
    %199 = arith.mulf %190, %6 : vector<16x32xf32>
    %200 = arith.mulf %192, %7 : vector<16x32xf32>
    %201 = arith.addf %199, %200 : vector<16x32xf32>
    %202 = arith.truncf %201 : vector<16x32xf32> to vector<16x32xbf16>
    %203 = vector.extract_strided_slice %198 {offsets = [0, 0], sizes = [16, 8], strides = [1, 1]} : vector<16x32xbf16> to vector<16x8xbf16>
    %204 = vector.extract_strided_slice %202 {offsets = [0, 0], sizes = [16, 8], strides = [1, 1]} : vector<16x32xbf16> to vector<16x8xbf16>
    %cst_84 = arith.constant dense<0.000000e+00> : vector<16x16xf32>
    %205 = tpu.matmul %203, %204, %cst_84 {dimension_numbers = #tpu.dot_dimension_numbers<[1], [1], [0], [0], [0, 0, 1, 0], [], []>} : vector<16x8xbf16>, vector<16x8xbf16>, vector<16x16xf32> -> vector<16x16xf32>
    %cst_85 = arith.constant 0.353553385 : f32
    %206 = vector.broadcast %cst_85 : f32 to vector<16x16xf32>
    %207 = arith.mulf %205, %206 : vector<16x16xf32>
    %208 = arith.addf %207, %8 : vector<16x16xf32>
    %cst_86 = arith.constant dense<0xFF800000> : vector<16xf32>
    %209 = vector.multi_reduction <maximumf>, %208, %cst_86 [1] : vector<16x16xf32> to vector<16xf32>
    %210 = vector.shape_cast %209 : vector<16xf32> to vector<16x1xf32>
    %211 = vector.broadcast %210 : vector<16x1xf32> to vector<16x16xf32>
    %212 = arith.subf %208, %211 : vector<16x16xf32>
    %213 = math.exp %212 : vector<16x16xf32>
    %cst_87 = arith.constant dense<0.000000e+00> : vector<16xf32>
    %214 = vector.multi_reduction <add>, %213, %cst_87 [1] : vector<16x16xf32> to vector<16xf32>
    %215 = vector.shape_cast %214 : vector<16xf32> to vector<16x1xf32>
    %216 = vector.broadcast %215 : vector<16x1xf32> to vector<16x16xf32>
    %217 = arith.divf %213, %216 : vector<16x16xf32>
    %218 = arith.truncf %217 : vector<16x16xf32> to vector<16x16xbf16>
    %219 = vector.extract_strided_slice %194 {offsets = [0, 0], sizes = [16, 8], strides = [1, 1]} : vector<16x32xbf16> to vector<16x8xbf16>
    %cst_88 = arith.constant dense<0.000000e+00> : vector<16x8xf32>
    %220 = tpu.matmul %218, %219, %cst_88 {dimension_numbers = #tpu.dot_dimension_numbers<[1], [0], [0], [1], [0, 0, 1, 1], [], []>} : vector<16x16xbf16>, vector<16x8xbf16>, vector<16x8xf32> -> vector<16x8xf32>
    %221 = vector.extract_strided_slice %198 {offsets = [0, 8], sizes = [16, 8], strides = [1, 1]} : vector<16x32xbf16> to vector<16x8xbf16>
    %222 = vector.extract_strided_slice %202 {offsets = [0, 8], sizes = [16, 8], strides = [1, 1]} : vector<16x32xbf16> to vector<16x8xbf16>
    %cst_89 = arith.constant dense<0.000000e+00> : vector<16x16xf32>
    %223 = tpu.matmul %221, %222, %cst_89 {dimension_numbers = #tpu.dot_dimension_numbers<[1], [1], [0], [0], [0, 0, 1, 0], [], []>} : vector<16x8xbf16>, vector<16x8xbf16>, vector<16x16xf32> -> vector<16x16xf32>
    %cst_90 = arith.constant 0.353553385 : f32
    %224 = vector.broadcast %cst_90 : f32 to vector<16x16xf32>
    %225 = arith.mulf %223, %224 : vector<16x16xf32>
    %226 = arith.addf %225, %8 : vector<16x16xf32>
    %cst_91 = arith.constant dense<0xFF800000> : vector<16xf32>
    %227 = vector.multi_reduction <maximumf>, %226, %cst_91 [1] : vector<16x16xf32> to vector<16xf32>
    %228 = vector.shape_cast %227 : vector<16xf32> to vector<16x1xf32>
    %229 = vector.broadcast %228 : vector<16x1xf32> to vector<16x16xf32>
    %230 = arith.subf %226, %229 : vector<16x16xf32>
    %231 = math.exp %230 : vector<16x16xf32>
    %cst_92 = arith.constant dense<0.000000e+00> : vector<16xf32>
    %232 = vector.multi_reduction <add>, %231, %cst_92 [1] : vector<16x16xf32> to vector<16xf32>
    %233 = vector.shape_cast %232 : vector<16xf32> to vector<16x1xf32>
    %234 = vector.broadcast %233 : vector<16x1xf32> to vector<16x16xf32>
    %235 = arith.divf %231, %234 : vector<16x16xf32>
    %236 = arith.truncf %235 : vector<16x16xf32> to vector<16x16xbf16>
    %237 = vector.extract_strided_slice %194 {offsets = [0, 8], sizes = [16, 8], strides = [1, 1]} : vector<16x32xbf16> to vector<16x8xbf16>
    %cst_93 = arith.constant dense<0.000000e+00> : vector<16x8xf32>
    %238 = tpu.matmul %236, %237, %cst_93 {dimension_numbers = #tpu.dot_dimension_numbers<[1], [0], [0], [1], [0, 0, 1, 1], [], []>} : vector<16x16xbf16>, vector<16x8xbf16>, vector<16x8xf32> -> vector<16x8xf32>
    %239 = vector.extract_strided_slice %198 {offsets = [0, 16], sizes = [16, 8], strides = [1, 1]} : vector<16x32xbf16> to vector<16x8xbf16>
    %240 = vector.extract_strided_slice %202 {offsets = [0, 16], sizes = [16, 8], strides = [1, 1]} : vector<16x32xbf16> to vector<16x8xbf16>
    %cst_94 = arith.constant dense<0.000000e+00> : vector<16x16xf32>
    %241 = tpu.matmul %239, %240, %cst_94 {dimension_numbers = #tpu.dot_dimension_numbers<[1], [1], [0], [0], [0, 0, 1, 0], [], []>} : vector<16x8xbf16>, vector<16x8xbf16>, vector<16x16xf32> -> vector<16x16xf32>
    %cst_95 = arith.constant 0.353553385 : f32
    %242 = vector.broadcast %cst_95 : f32 to vector<16x16xf32>
    %243 = arith.mulf %241, %242 : vector<16x16xf32>
    %244 = arith.addf %243, %8 : vector<16x16xf32>
    %cst_96 = arith.constant dense<0xFF800000> : vector<16xf32>
    %245 = vector.multi_reduction <maximumf>, %244, %cst_96 [1] : vector<16x16xf32> to vector<16xf32>
    %246 = vector.shape_cast %245 : vector<16xf32> to vector<16x1xf32>
    %247 = vector.broadcast %246 : vector<16x1xf32> to vector<16x16xf32>
    %248 = arith.subf %244, %247 : vector<16x16xf32>
    %249 = math.exp %248 : vector<16x16xf32>
    %cst_97 = arith.constant dense<0.000000e+00> : vector<16xf32>
    %250 = vector.multi_reduction <add>, %249, %cst_97 [1] : vector<16x16xf32> to vector<16xf32>
    %251 = vector.shape_cast %250 : vector<16xf32> to vector<16x1xf32>
    %252 = vector.broadcast %251 : vector<16x1xf32> to vector<16x16xf32>
    %253 = arith.divf %249, %252 : vector<16x16xf32>
    %254 = arith.truncf %253 : vector<16x16xf32> to vector<16x16xbf16>
    %255 = vector.extract_strided_slice %194 {offsets = [0, 16], sizes = [16, 8], strides = [1, 1]} : vector<16x32xbf16> to vector<16x8xbf16>
    %cst_98 = arith.constant dense<0.000000e+00> : vector<16x8xf32>
    %256 = tpu.matmul %254, %255, %cst_98 {dimension_numbers = #tpu.dot_dimension_numbers<[1], [0], [0], [1], [0, 0, 1, 1], [], []>} : vector<16x16xbf16>, vector<16x8xbf16>, vector<16x8xf32> -> vector<16x8xf32>
    %257 = vector.extract_strided_slice %198 {offsets = [0, 24], sizes = [16, 8], strides = [1, 1]} : vector<16x32xbf16> to vector<16x8xbf16>
    %258 = vector.extract_strided_slice %202 {offsets = [0, 24], sizes = [16, 8], strides = [1, 1]} : vector<16x32xbf16> to vector<16x8xbf16>
    %cst_99 = arith.constant dense<0.000000e+00> : vector<16x16xf32>
    %259 = tpu.matmul %257, %258, %cst_99 {dimension_numbers = #tpu.dot_dimension_numbers<[1], [1], [0], [0], [0, 0, 1, 0], [], []>} : vector<16x8xbf16>, vector<16x8xbf16>, vector<16x16xf32> -> vector<16x16xf32>
    %cst_100 = arith.constant 0.353553385 : f32
    %260 = vector.broadcast %cst_100 : f32 to vector<16x16xf32>
    %261 = arith.mulf %259, %260 : vector<16x16xf32>
    %262 = arith.addf %261, %8 : vector<16x16xf32>
    %cst_101 = arith.constant dense<0xFF800000> : vector<16xf32>
    %263 = vector.multi_reduction <maximumf>, %262, %cst_101 [1] : vector<16x16xf32> to vector<16xf32>
    %264 = vector.shape_cast %263 : vector<16xf32> to vector<16x1xf32>
    %265 = vector.broadcast %264 : vector<16x1xf32> to vector<16x16xf32>
    %266 = arith.subf %262, %265 : vector<16x16xf32>
    %267 = math.exp %266 : vector<16x16xf32>
    %cst_102 = arith.constant dense<0.000000e+00> : vector<16xf32>
    %268 = vector.multi_reduction <add>, %267, %cst_102 [1] : vector<16x16xf32> to vector<16xf32>
    %269 = vector.shape_cast %268 : vector<16xf32> to vector<16x1xf32>
    %270 = vector.broadcast %269 : vector<16x1xf32> to vector<16x16xf32>
    %271 = arith.divf %267, %270 : vector<16x16xf32>
    %272 = arith.truncf %271 : vector<16x16xf32> to vector<16x16xbf16>
    %273 = vector.extract_strided_slice %194 {offsets = [0, 24], sizes = [16, 8], strides = [1, 1]} : vector<16x32xbf16> to vector<16x8xbf16>
    %cst_103 = arith.constant dense<0.000000e+00> : vector<16x8xf32>
    %274 = tpu.matmul %272, %273, %cst_103 {dimension_numbers = #tpu.dot_dimension_numbers<[1], [0], [0], [1], [0, 0, 1, 1], [], []>} : vector<16x16xbf16>, vector<16x8xbf16>, vector<16x8xf32> -> vector<16x8xf32>
    %275 = tpu.concatenate %220, %238, %256, %274 in 1 : vector<16x8xf32>, vector<16x8xf32>, vector<16x8xf32>, vector<16x8xf32> -> vector<16x32xf32>
    %276 = arith.truncf %275 : vector<16x32xf32> to vector<16x32xbf16>
    %c1_104 = arith.constant 1 : index
    %c0_105 = arith.constant 0 : index
    %c0_106 = arith.constant 0 : index
    %277 = vector.load %arg9[%c1_104, %c0_105, %c0_106] : memref<2x32x32xbf16, #tpu.memory_space<vmem>>, vector<1x32x32xbf16>
    %278 = vector.shape_cast %277 : vector<1x32x32xbf16> to vector<32x32xbf16>
    %cst_107 = arith.constant dense<0.000000e+00> : vector<16x32xf32>
    %279 = tpu.matmul %276, %278, %cst_107 {dimension_numbers = #tpu.dot_dimension_numbers<[1], [0], [0], [1], [0, 0, 1, 1], [], []>} : vector<16x32xbf16>, vector<32x32xbf16>, vector<16x32xf32> -> vector<16x32xf32>
    %280 = arith.addf %166, %279 : vector<16x32xf32>
    %c1_108 = arith.constant 1 : index
    %c0_109 = arith.constant 0 : index
    %c0_110 = arith.constant 0 : index
    %281 = vector.load %arg10[%c1_108, %c0_109, %c0_110] : memref<2x1x32xf32, #tpu.memory_space<vmem>>, vector<1x1x32xf32>
    %282 = vector.shape_cast %281 : vector<1x1x32xf32> to vector<1x32xf32>
    %283 = vector.broadcast %282 : vector<1x32xf32> to vector<16x32xf32>
    %284 = arith.addf %280, %283 : vector<16x32xf32>
    %c1_111 = arith.constant 1 : index
    %c0_112 = arith.constant 0 : index
    %c0_113 = arith.constant 0 : index
    %285 = vector.load %arg11[%c1_111, %c0_112, %c0_113] : memref<2x1x32xf32, #tpu.memory_space<vmem>>, vector<1x1x32xf32>
    %286 = vector.shape_cast %285 : vector<1x1x32xf32> to vector<1x32xf32>
    %287 = arith.mulf %284, %284 : vector<16x32xf32>
    %cst_114 = arith.constant dense<0.000000e+00> : vector<16xf32>
    %288 = vector.multi_reduction <add>, %287, %cst_114 [1] : vector<16x32xf32> to vector<16xf32>
    %289 = vector.shape_cast %288 : vector<16xf32> to vector<16x1xf32>
    %cst_115 = arith.constant 3.200000e+01 : f32
    %290 = vector.broadcast %cst_115 : f32 to vector<16x1xf32>
    %291 = arith.divf %289, %290 : vector<16x1xf32>
    %cst_116 = arith.constant 9.99999974E-6 : f32
    %292 = vector.broadcast %cst_116 : f32 to vector<16x1xf32>
    %293 = arith.addf %291, %292 : vector<16x1xf32>
    %294 = math.rsqrt %293 : vector<16x1xf32>
    %295 = vector.broadcast %294 : vector<16x1xf32> to vector<16x32xf32>
    %296 = arith.mulf %284, %295 : vector<16x32xf32>
    %297 = vector.broadcast %286 : vector<1x32xf32> to vector<16x32xf32>
    %298 = arith.mulf %296, %297 : vector<16x32xf32>
    %299 = arith.truncf %298 : vector<16x32xf32> to vector<16x32xbf16>
    %c1_117 = arith.constant 1 : index
    %c0_118 = arith.constant 0 : index
    %c0_119 = arith.constant 0 : index
    %300 = vector.load %arg12[%c1_117, %c0_118, %c0_119] : memref<2x32x256xbf16, #tpu.memory_space<vmem>>, vector<1x32x256xbf16>
    %301 = vector.shape_cast %300 : vector<1x32x256xbf16> to vector<32x256xbf16>
    %cst_120 = arith.constant dense<0.000000e+00> : vector<16x256xf32>
    %302 = tpu.matmul %299, %301, %cst_120 {dimension_numbers = #tpu.dot_dimension_numbers<[1], [0], [0], [1], [0, 0, 1, 1], [], []>} : vector<16x32xbf16>, vector<32x256xbf16>, vector<16x256xf32> -> vector<16x256xf32>
    %c1_121 = arith.constant 1 : index
    %c0_122 = arith.constant 0 : index
    %c0_123 = arith.constant 0 : index
    %303 = vector.load %arg13[%c1_121, %c0_122, %c0_123] : memref<2x1x256xf32, #tpu.memory_space<vmem>>, vector<1x1x256xf32>
    %304 = vector.shape_cast %303 : vector<1x1x256xf32> to vector<1x256xf32>
    %305 = vector.broadcast %304 : vector<1x256xf32> to vector<16x256xf32>
    %306 = arith.addf %302, %305 : vector<16x256xf32>
    %307 = vector.extract_strided_slice %306 {offsets = [0, 0], sizes = [16, 128], strides = [1, 1]} : vector<16x256xf32> to vector<16x128xf32>
    %308 = vector.extract_strided_slice %306 {offsets = [0, 128], sizes = [16, 128], strides = [1, 1]} : vector<16x256xf32> to vector<16x128xf32>
    %309 = arith.negf %307 : vector<16x128xf32>
    %310 = math.exp %309 : vector<16x128xf32>
    %cst_124 = arith.constant 1.000000e+00 : f32
    %311 = vector.broadcast %cst_124 : f32 to vector<16x128xf32>
    %312 = arith.addf %311, %310 : vector<16x128xf32>
    %313 = arith.divf %311, %312 : vector<16x128xf32>
    %314 = arith.mulf %307, %313 : vector<16x128xf32>
    %315 = arith.mulf %314, %308 : vector<16x128xf32>
    %316 = arith.truncf %315 : vector<16x128xf32> to vector<16x128xbf16>
    %c1_125 = arith.constant 1 : index
    %c0_126 = arith.constant 0 : index
    %c0_127 = arith.constant 0 : index
    %317 = vector.load %arg14[%c1_125, %c0_126, %c0_127] : memref<2x128x32xbf16, #tpu.memory_space<vmem>>, vector<1x128x32xbf16>
    %318 = vector.shape_cast %317 : vector<1x128x32xbf16> to vector<128x32xbf16>
    %cst_128 = arith.constant dense<0.000000e+00> : vector<16x32xf32>
    %319 = tpu.matmul %316, %318, %cst_128 {dimension_numbers = #tpu.dot_dimension_numbers<[1], [0], [0], [1], [0, 0, 1, 1], [], []>} : vector<16x128xbf16>, vector<128x32xbf16>, vector<16x32xf32> -> vector<16x32xf32>
    %320 = arith.addf %284, %319 : vector<16x32xf32>
    %c1_129 = arith.constant 1 : index
    %c0_130 = arith.constant 0 : index
    %c0_131 = arith.constant 0 : index
    %321 = vector.load %arg15[%c1_129, %c0_130, %c0_131] : memref<2x1x32xf32, #tpu.memory_space<vmem>>, vector<1x1x32xf32>
    %322 = vector.shape_cast %321 : vector<1x1x32xf32> to vector<1x32xf32>
    %323 = vector.broadcast %322 : vector<1x32xf32> to vector<16x32xf32>
    %324 = arith.addf %320, %323 : vector<16x32xf32>
    %c0_132 = arith.constant 0 : index
    %c0_133 = arith.constant 0 : index
    %325 = vector.load %arg16[%c0_132, %c0_133] : memref<1x32xf32, #tpu.memory_space<vmem>>, vector<1x32xf32>
    %326 = arith.mulf %324, %324 : vector<16x32xf32>
    %cst_134 = arith.constant dense<0.000000e+00> : vector<16xf32>
    %327 = vector.multi_reduction <add>, %326, %cst_134 [1] : vector<16x32xf32> to vector<16xf32>
    %328 = vector.shape_cast %327 : vector<16xf32> to vector<16x1xf32>
    %cst_135 = arith.constant 3.200000e+01 : f32
    %329 = vector.broadcast %cst_135 : f32 to vector<16x1xf32>
    %330 = arith.divf %328, %329 : vector<16x1xf32>
    %cst_136 = arith.constant 9.99999974E-6 : f32
    %331 = vector.broadcast %cst_136 : f32 to vector<16x1xf32>
    %332 = arith.addf %330, %331 : vector<16x1xf32>
    %333 = math.rsqrt %332 : vector<16x1xf32>
    %334 = vector.broadcast %333 : vector<16x1xf32> to vector<16x32xf32>
    %335 = arith.mulf %324, %334 : vector<16x32xf32>
    %336 = vector.broadcast %325 : vector<1x32xf32> to vector<16x32xf32>
    %337 = arith.mulf %335, %336 : vector<16x32xf32>
    %338 = arith.truncf %337 : vector<16x32xf32> to vector<16x32xbf16>
    %c0_137 = arith.constant 0 : index
    %c0_138 = arith.constant 0 : index
    %339 = vector.load %arg17[%c0_137, %c0_138] : memref<32x128xbf16, #tpu.memory_space<vmem>>, vector<32x128xbf16>
    %cst_139 = arith.constant dense<0.000000e+00> : vector<16x128xf32>
    %340 = tpu.matmul %338, %339, %cst_139 {dimension_numbers = #tpu.dot_dimension_numbers<[1], [0], [0], [1], [0, 0, 1, 1], [], []>} : vector<16x32xbf16>, vector<32x128xbf16>, vector<16x128xf32> -> vector<16x128xf32>
    %c0_140 = arith.constant 0 : index
    %c0_141 = arith.constant 0 : index
    %341 = vector.load %arg18[%c0_140, %c0_141] : memref<1x128xf32, #tpu.memory_space<vmem>>, vector<1x128xf32>
    %342 = vector.broadcast %341 : vector<1x128xf32> to vector<16x128xf32>
    %343 = arith.addf %340, %342 : vector<16x128xf32>
    %c0_142 = arith.constant 0 : index
    %c0_143 = arith.constant 0 : index
    %344 = vector.load %arg19[%c0_142, %c0_143] : memref<16x128xf32, #tpu.memory_space<vmem>>, vector<16x128xf32>
    tpu.vector_store %arg19[%c0_142, %c0_143], %343 {strides = array<i32>} : memref<16x128xf32, #tpu.memory_space<vmem>>, vector<16x128xf32>,
    return
  }
}

</mosaic_0001>

<llo_original>
// kernel: tpu_custom_call.1
$region0: #{tpu_custom_call.1}
  #allocation0 [shape = 'u32[]', space=smem, size = 0x4, offset = 0x4, fixed_abs, tag = 'smem constant byte address 0x4 - core index']
  #allocation1 [shape = 'u32[72,128]{1,0:T(1,128)}', space=vmem, size = 0x9000, scoped, tag = 'internal scratch']
  %s0 = inlined_call_operand.hbm [shape: bf16[16,16], index: 0, kind: input, shape index: {}]
  %s1 = inlined_call_operand.hbm [shape: bf16[16,32], index: 1, kind: input, shape index: {}]
  %s2 = inlined_call_operand.vmem [shape: f32[1,32], index: 2, kind: input, shape index: {}]
  %s3 = inlined_call_operand.hbm [shape: f32[16,32], index: 3, kind: input, shape index: {}]
  %s4 = inlined_call_operand.hbm [shape: f32[16,32], index: 4, kind: input, shape index: {}]
  %s5 = inlined_call_operand.hbm [shape: f32[16,16], index: 5, kind: input, shape index: {}]
  %s6 = inlined_call_operand.hbm [shape: f32[2,1,32], index: 6, kind: input, shape index: {}]
  %s7 = inlined_call_operand.vmem [shape: bf16[2,32,160], index: 7, kind: input, shape index: {}]
  %s8 = inlined_call_operand.vmem [shape: f32[2,1,160], index: 8, kind: input, shape index: {}]
  %s9 = inlined_call_operand.vmem [shape: bf16[2,32,32], index: 9, kind: input, shape index: {}]
  %s10 = inlined_call_operand.hbm [shape: f32[2,1,32], index: 10, kind: input, shape index: {}]
  %s11 = inlined_call_operand.hbm [shape: f32[2,1,32], index: 11, kind: input, shape index: {}]
  %s12 = inlined_call_operand.vmem [shape: bf16[2,32,256], index: 12, kind: input, shape index: {}]
  %s13 = inlined_call_operand.vmem [shape: f32[2,1,256], index: 13, kind: input, shape index: {}]
  %s14 = inlined_call_operand.vmem [shape: bf16[2,128,32], index: 14, kind: input, shape index: {}]
  %s15 = inlined_call_operand.vmem [shape: f32[2,1,32], index: 15, kind: input, shape index: {}]
  %s16 = inlined_call_operand.vmem [shape: f32[1,32], index: 16, kind: input, shape index: {}]
  %s17 = inlined_call_operand.hbm [shape: bf16[32,128], index: 17, kind: input, shape index: {}]
  %s18 = inlined_call_operand.vmem [shape: f32[1,128], index: 18, kind: input, shape index: {}]
  %s19 = inlined_call_operand.hbm [shape: f32[16,128], index: 19, kind: output, shape index: {}]
  %s20 = sld [smem:[#allocation0]]
  $region122: #{tpu_custom_call.1} parent=0
    _
  %s22 = ssub.s32 1, %s20
  %s23 = scalar_select 0, %s22, %s20
  $region1: #{tpu_custom_call.1} parent=0
    #allocation2 [shape = 'u8[4096]{0}', space=vmem, size = 0x1000, scoped, tag = 'input window, operand 0, single buffered']
    #allocation3 [shape = 's32[1]{0}', space=sflag, size = 0x4, scoped, tag = 'scoped memory for tpu_custom_call.1']
    #allocation4 [shape = 's32[1]{0}', space=sflag, size = 0x4, scoped, tag = 'scoped memory for tpu_custom_call.1']
    #allocation5 [shape = 'u8[4096]{0}', space=vmem, size = 0x1000, scoped, tag = 'input window, operand 1, single buffered']
    #allocation6 [shape = 's32[1]{0}', space=sflag, size = 0x4, scoped, tag = 'scoped memory for tpu_custom_call.1']
    #allocation7 [shape = 'u8[8192]{0}', space=vmem, size = 0x2000, scoped, tag = 'input window, operand 3, single buffered']
    #allocation8 [shape = 'u8[8192]{0}', space=vmem, size = 0x2000, scoped, tag = 'input window, operand 4, single buffered']
    #allocation9 [shape = 's32[1]{0}', space=sflag, size = 0x4, scoped, tag = 'scoped memory for tpu_custom_call.1']
    #allocation10 [shape = 'u8[8192]{0}', space=vmem, size = 0x2000, scoped, tag = 'input window, operand 5, single buffered']
    #allocation11 [shape = 'u8[1024]{0}', space=vmem, size = 0x400, scoped, tag = 'input window, operand 6, single buffered']
    #allocation12 [shape = 's32[1]{0}', space=sflag, size = 0x4, scoped, tag = 'scoped memory for tpu_custom_call.1']
    #allocation13 [shape = 'u8[1024]{0}', space=vmem, size = 0x400, scoped, tag = 'input window, operand 10, single buffered']
    #allocation14 [shape = 'u8[1024]{0}', space=vmem, size = 0x400, scoped, tag = 'input window, operand 11, single buffered']
    #allocation15 [shape = 's32[1]{0}', space=sflag, size = 0x4, scoped, tag = 'scoped memory for tpu_custom_call.1']
    #allocation16 [shape = 'u8[8192]{0}', space=vmem, size = 0x2000, scoped, tag = 'input window, operand 17, single buffered']
    #allocation17 [shape = 'u8[8192]{0}', space=vmem, size = 0x2000, scoped, tag = 'output window, operand 0, single buffered']
    %24 = vsyncpa [#allocation3], 0
    %25 = vsyncpa [#allocation6], 0
    %26 = vsyncpa [#allocation9], 0
    %27 = vsyncpa [#allocation12], 0
    %28 = vsyncpa [#allocation15], 0
    %29 = vsyncpa [#allocation4], 0
    // Predicated region
    $region2: #{tpu_custom_call.1} parent=1 // pred_check
      _
    $region3: #{tpu_custom_call.1} parent=1 // pred_check_branch
      %31 = sbr.rel (0) target = $region5
    $region4: #{tpu_custom_call.1} parent=1 // pred_region
      %33 = vsyncadd [#allocation3], 0
      %s34 = sshll.u32 %s0, 4
      %s35 = int_to_ptr.hbm [resolvable:$true] %s34
      %s36 = sshll.u32 [#allocation2], 4
      %s37 = int_to_ptr.vmem [resolvable:$true] %s36
      %42 = dma.hbm_to_vmem [thread:$0]  %s35, 128, %s37, [#allocation3], 64, 64, 4
    $region5: #{tpu_custom_call.1} parent=1 // pred_fallthru
      _
    // Predicated region
    $region6: #{tpu_custom_call.1} parent=1 // pred_check
      _
    $region7: #{tpu_custom_call.1} parent=1 // pred_check_branch
      %44 = sbr.rel (0) target = $region9
    $region8: #{tpu_custom_call.1} parent=1 // pred_region
      %46 = vsyncadd [#allocation6], 0
      %s47 = sshll.u32 %s1, 4
      %s48 = int_to_ptr.hbm [resolvable:$true] %s47
      %s49 = sshll.u32 [#allocation5], 4
      %s50 = int_to_ptr.vmem [resolvable:$true] %s49
      %55 = dma.hbm_to_vmem [thread:$0]  %s48, 128, %s50, [#allocation6], 64, 64, 4
    $region9: #{tpu_custom_call.1} parent=1 // pred_fallthru
      _
    // Predicated region
    $region10: #{tpu_custom_call.1} parent=1 // pred_check
      _
    $region11: #{tpu_custom_call.1} parent=1 // pred_check_branch
      %57 = sbr.rel (0) target = $region13
    $region12: #{tpu_custom_call.1} parent=1 // pred_region
      _
    $region13: #{tpu_custom_call.1} parent=1 // pred_fallthru
      _
    // Predicated region
    $region14: #{tpu_custom_call.1} parent=1 // pred_check
      _
    $region15: #{tpu_custom_call.1} parent=1 // pred_check_branch
      %59 = sbr.rel (0) target = $region17
    $region16: #{tpu_custom_call.1} parent=1 // pred_region
      %61 = vsyncadd [#allocation6], 0
      %s62 = sshll.u32 %s3, 4
      %s63 = int_to_ptr.hbm [resolvable:$true] %s62
      %s64 = sshll.u32 [#allocation7], 4
      %s65 = int_to_ptr.vmem [resolvable:$true] %s64
      %70 = dma.hbm_to_vmem [thread:$0]  %s63, 256, %s65, [#allocation6], 128, 128, 8
    $region17: #{tpu_custom_call.1} parent=1 // pred_fallthru
      _
    // Predicated region
    $region18: #{tpu_custom_call.1} parent=1 // pred_check
      _
    $region19: #{tpu_custom_call.1} parent=1 // pred_check_branch
      %72 = sbr.rel (0) target = $region21
    $region20: #{tpu_custom_call.1} parent=1 // pred_region
      %74 = vsyncadd [#allocation9], 0
      %s75 = sshll.u32 %s4, 4
      %s76 = int_to_ptr.hbm [resolvable:$true] %s75
      %s77 = sshll.u32 [#allocation8], 4
      %s78 = int_to_ptr.vmem [resolvable:$true] %s77
      %83 = dma.hbm_to_vmem [thread:$0]  %s76, 256, %s78, [#allocation9], 128, 128, 8
    $region21: #{tpu_custom_call.1} parent=1 // pred_fallthru
      _
    // Predicated region
    $region22: #{tpu_custom_call.1} parent=1 // pred_check
      _
    $region23: #{tpu_custom_call.1} parent=1 // pred_check_branch
      %85 = sbr.rel (0) target = $region25
    $region24: #{tpu_custom_call.1} parent=1 // pred_region
      %87 = vsyncadd [#allocation9], 0
      %s88 = sshll.u32 %s5, 4
      %s89 = int_to_ptr.hbm [resolvable:$true] %s88
      %s90 = sshll.u32 [#allocation10], 4
      %s91 = int_to_ptr.vmem [resolvable:$true] %s90
      %96 = dma.hbm_to_vmem [thread:$0]  %s89, 256, %s91, [#allocation9], 128, 128, 8
    $region25: #{tpu_custom_call.1} parent=1 // pred_fallthru
      _
    // Predicated region
    $region26: #{tpu_custom_call.1} parent=1 // pred_check
      _
    $region27: #{tpu_custom_call.1} parent=1 // pred_check_branch
      %98 = sbr.rel (0) target = $region29
    $region28: #{tpu_custom_call.1} parent=1 // pred_region
      %100 = vsyncadd [#allocation12], 0
      %s101 = sshll.u32 %s6, 4
      %s102 = int_to_ptr.hbm [resolvable:$true] %s101
      %s103 = sshll.u32 [#allocation11], 4
      %s104 = int_to_ptr.vmem [resolvable:$true] %s103
      %109 = dma.hbm_to_vmem [thread:$0]  %s102, 32, %s104, [#allocation12], 16, 16, 1
    $region29: #{tpu_custom_call.1} parent=1 // pred_fallthru
      _
    // Predicated region
    $region30: #{tpu_custom_call.1} parent=1 // pred_check
      _
    $region31: #{tpu_custom_call.1} parent=1 // pred_check_branch
      %111 = sbr.rel (0) target = $region33
    $region32: #{tpu_custom_call.1} parent=1 // pred_region
      _
    $region33: #{tpu_custom_call.1} parent=1 // pred_fallthru
      _
    // Predicated region
    $region34: #{tpu_custom_call.1} parent=1 // pred_check
      _
    $region35: #{tpu_custom_call.1} parent=1 // pred_check_branch
      %113 = sbr.rel (0) target = $region37
    $region36: #{tpu_custom_call.1} parent=1 // pred_region
      _
    $region37: #{tpu_custom_call.1} parent=1 // pred_fallthru
      _
    // Predicated region
    $region38: #{tpu_custom_call.1} parent=1 // pred_check
      _
    $region39: #{tpu_custom_call.1} parent=1 // pred_check_branch
      %115 = sbr.rel (0) target = $region41
    $region40: #{tpu_custom_call.1} parent=1 // pred_region
      _
    $region41: #{tpu_custom_call.1} parent=1 // pred_fallthru
      _
    // Predicated region
    $region42: #{tpu_custom_call.1} parent=1 // pred_check
      _
    $region43: #{tpu_custom_call.1} parent=1 // pred_check_branch
      %117 = sbr.rel (0) target = $region45
    $region44: #{tpu_custom_call.1} parent=1 // pred_region
      %119 = vsyncadd [#allocation12], 0
      %s120 = sshll.u32 %s10, 4
      %s121 = int_to_ptr.hbm [resolvable:$true] %s120
      %s122 = sshll.u32 [#allocation13], 4
      %s123 = int_to_ptr.vmem [resolvable:$true] %s122
      %128 = dma.hbm_to_vmem [thread:$0]  %s121, 32, %s123, [#allocation12], 16, 16, 1
    $region45: #{tpu_custom_call.1} parent=1 // pred_fallthru
      _
    // Predicated region
    $region46: #{tpu_custom_call.1} parent=1 // pred_check
      _
    $region47: #{tpu_custom_call.1} parent=1 // pred_check_branch
      %130 = sbr.rel (0) target = $region49
    $region48: #{tpu_custom_call.1} parent=1 // pred_region
      %132 = vsyncadd [#allocation15], 0
      %s133 = sshll.u32 %s11, 4
      %s134 = int_to_ptr.hbm [resolvable:$true] %s133
      %s135 = sshll.u32 [#allocation14], 4
      %s136 = int_to_ptr.vmem [resolvable:$true] %s135
      %141 = dma.hbm_to_vmem [thread:$0]  %s134, 32, %s136, [#allocation15], 16, 16, 1
    $region49: #{tpu_custom_call.1} parent=1 // pred_fallthru
      _
    // Predicated region
    $region50: #{tpu_custom_call.1} parent=1 // pred_check
      _
    $region51: #{tpu_custom_call.1} parent=1 // pred_check_branch
      %143 = sbr.rel (0) target = $region53
    $region52: #{tpu_custom_call.1} parent=1 // pred_region
      _
    $region53: #{tpu_custom_call.1} parent=1 // pred_fallthru
      _
    // Predicated region
    $region54: #{tpu_custom_call.1} parent=1 // pred_check
      _
    $region55: #{tpu_custom_call.1} parent=1 // pred_check_branch
      %145 = sbr.rel (0) target = $region57
    $region56: #{tpu_custom_call.1} parent=1 // pred_region
      _
    $region57: #{tpu_custom_call.1} parent=1 // pred_fallthru
      _
    // Predicated region
    $region58: #{tpu_custom_call.1} parent=1 // pred_check
      _
    $region59: #{tpu_custom_call.1} parent=1 // pred_check_branch
      %147 = sbr.rel (0) target = $region61
    $region60: #{tpu_custom_call.1} parent=1 // pred_region
      _
    $region61: #{tpu_custom_call.1} parent=1 // pred_fallthru
      _
    // Predicated region
    $region62: #{tpu_custom_call.1} parent=1 // pred_check
      _
    $region63: #{tpu_custom_call.1} parent=1 // pred_check_branch
      %149 = sbr.rel (0) target = $region65
    $region64: #{tpu_custom_call.1} parent=1 // pred_region
      _
    $region65: #{tpu_custom_call.1} parent=1 // pred_fallthru
      _
    // Predicated region
    $region66: #{tpu_custom_call.1} parent=1 // pred_check
      _
    $region67: #{tpu_custom_call.1} parent=1 // pred_check_branch
      %151 = sbr.rel (0) target = $region69
    $region68: #{tpu_custom_call.1} parent=1 // pred_region
      _
    $region69: #{tpu_custom_call.1} parent=1 // pred_fallthru
      _
    // Predicated region
    $region70: #{tpu_custom_call.1} parent=1 // pred_check
      _
    $region71: #{tpu_custom_call.1} parent=1 // pred_check_branch
      %153 = sbr.rel (0) target = $region73
    $region72: #{tpu_custom_call.1} parent=1 // pred_region
      %155 = vsyncadd [#allocation15], 0
      %s156 = sshll.u32 %s17, 4
      %s157 = int_to_ptr.hbm [resolvable:$true] %s156
      %s158 = sshll.u32 [#allocation16], 4
      %s159 = int_to_ptr.vmem [resolvable:$true] %s158
      %164 = dma.hbm_to_vmem [thread:$0]  %s157, 256, %s159, [#allocation15], 64, 64, 4
    $region73: #{tpu_custom_call.1} parent=1 // pred_fallthru
      _
    // Predicated region
    $region74: #{tpu_custom_call.1} parent=1 // pred_check
      _
    $region75: #{tpu_custom_call.1} parent=1 // pred_check_branch
      %166 = sbr.rel (0) target = $region77
    $region76: #{tpu_custom_call.1} parent=1 // pred_region
      _
    $region77: #{tpu_custom_call.1} parent=1 // pred_fallthru
      _
    // Predicated region
    $region78: #{tpu_custom_call.1} parent=1 // pred_check
      _
    $region79: #{tpu_custom_call.1} parent=1 // pred_check_branch
      %168 = sbr.rel (0) target = $region81
    $region80: #{tpu_custom_call.1} parent=1 // pred_region
      %170 = dma.done [#allocation3], 128
    $region81: #{tpu_custom_call.1} parent=1 // pred_fallthru
      _
    // Predicated region
    $region82: #{tpu_custom_call.1} parent=1 // pred_check
      _
    $region83: #{tpu_custom_call.1} parent=1 // pred_check_branch
      %172 = sbr.rel (0) target = $region85
    $region84: #{tpu_custom_call.1} parent=1 // pred_region
      %174 = dma.done [#allocation6], 128
    $region85: #{tpu_custom_call.1} parent=1 // pred_fallthru
      _
    // Predicated region
    $region86: #{tpu_custom_call.1} parent=1 // pred_check
      _
    $region87: #{tpu_custom_call.1} parent=1 // pred_check_branch
      %176 = sbr.rel (0) target = $region89
    $region88: #{tpu_custom_call.1} parent=1 // pred_region
      %178 = dma.done [#allocation6], 256
    $region89: #{tpu_custom_call.1} parent=1 // pred_fallthru
      _
    // Predicated region
    $region90: #{tpu_custom_call.1} parent=1 // pred_check
      _
    $region91: #{tpu_custom_call.1} parent=1 // pred_check_branch
      %180 = sbr.rel (0) target = $region93
    $region92: #{tpu_custom_call.1} parent=1 // pred_region
      %182 = dma.done [#allocation9], 256
    $region93: #{tpu_custom_call.1} parent=1 // pred_fallthru
      _
    // Predicated region
    $region94: #{tpu_custom_call.1} parent=1 // pred_check
      _
    $region95: #{tpu_custom_call.1} parent=1 // pred_check_branch
      %184 = sbr.rel (0) target = $region97
    $region96: #{tpu_custom_call.1} parent=1 // pred_region
      %186 = dma.done [#allocation9], 256
    $region97: #{tpu_custom_call.1} parent=1 // pred_fallthru
      _
    // Predicated region
    $region98: #{tpu_custom_call.1} parent=1 // pred_check
      _
    $region99: #{tpu_custom_call.1} parent=1 // pred_check_branch
      %188 = sbr.rel (0) target = $region101
    $region100: #{tpu_custom_call.1} parent=1 // pred_region
      %190 = dma.done [#allocation12], 32
    $region101: #{tpu_custom_call.1} parent=1 // pred_fallthru
      _
    // Predicated region
    $region102: #{tpu_custom_call.1} parent=1 // pred_check
      _
    $region103: #{tpu_custom_call.1} parent=1 // pred_check_branch
      %192 = sbr.rel (0) target = $region105
    $region104: #{tpu_custom_call.1} parent=1 // pred_region
      %194 = dma.done [#allocation12], 32
    $region105: #{tpu_custom_call.1} parent=1 // pred_fallthru
      _
    // Predicated region
    $region106: #{tpu_custom_call.1} parent=1 // pred_check
      _
    $region107: #{tpu_custom_call.1} parent=1 // pred_check_branch
      %196 = sbr.rel (0) target = $region109
    $region108: #{tpu_custom_call.1} parent=1 // pred_region
      %198 = dma.done [#allocation15], 32
    $region109: #{tpu_custom_call.1} parent=1 // pred_fallthru
      _
    // Predicated region
    $region110: #{tpu_custom_call.1} parent=1 // pred_check
      _
    $region111: #{tpu_custom_call.1} parent=1 // pred_check_branch
      %200 = sbr.rel (0) target = $region113
    $region112: #{tpu_custom_call.1} parent=1 // pred_region
      %202 = dma.done [#allocation15], 256
    $region113: #{tpu_custom_call.1} parent=1 // pred_fallthru
      _
    %v204 = vld [vmem:[#allocation2] sm:$0xf]
    %v205 = vld [vmem:[#allocation2 + $0x4] sm:$0xf]
    %v206 = vld [vmem:[#allocation5] sm:$0xf]
    %v207 = vld [vmem:[#allocation5 + $0x4] sm:$0xf]
    %v208 = vld [vmem:[%s2] sm:$0x1]
    %v210 = vperm.slane %v208, 0
    %v214 = vunpack.c.l.b16 %v204
    %v215 = vunpack.c.l.b16 %v205
    %v216 = vpack.c.b16 %v215, %v214
    %v219 = vunpack.c.l.b16 %v206
    %v220 = vunpack.c.l.b16 %v207
    %v221 = vpack.c.b16 %v220, %v219
    %vm223 = vcmask 130048
    %v225 = vsel %vm223, %v216, 0
    %227 = vmatpush.bf16.msra.mxu0 0
    %228 = vmatpush.bf16.msra.mxu0 0
    %229 = vmatpush.bf16.msra.mxu0 0
    %230 = vmatpush.bf16.msra.mxu0 0
    %231 = vmatpush.bf16.msra.mxu0 0
    %232 = vmatpush.bf16.msra.mxu0 0
    %233 = vmatpush.bf16.msra.mxu0 0
    %234 = vmatpush.bf16.msra.mxu0 %v221
    %235 = vmatmul.bf16.gmra.mxu0 %v225
    %v236 = vpop.f32.mrf.mxu0
    %v237 = vadd.f32 %v210, %v236
    %v238 = vpop.f32.mrf.mxu0
    %v239 = vadd.f32 %v210, %v238
    %240 = vdwg.mxu0
    %v241 = vld [vmem:[#allocation7] sm:$0xff]
    %v242 = vld [vmem:[#allocation7 + $0x8] sm:$0xff]
    %v243 = vld [vmem:[#allocation8] sm:$0xff]
    %v244 = vld [vmem:[#allocation8 + $0x8] sm:$0xff]
    %v245 = vld [vmem:[#allocation10] sm:$0xff]
    %v246 = vld [vmem:[#allocation10 + $0x8] sm:$0xff]
    %v247 = vld [vmem:[#allocation11] sm:$0x1]
    %v248 = vmul.f32 %v237, %v237
    %v249 = vmul.f32 %v239, %v239
    %vm250 = vcmask 261120
    %v251 = vsel %vm250, %v248, 0.0
    %252 = vadd.xlane.f32.xlu0 %v251
    %v253 = vpop.xlane.xlu0 %252
    %v254 = vsel %vm250, %v249, 0.0
    %255 = vadd.xlane.f32.xlu0 %v254
    %v256 = vpop.xlane.xlu0 %255
    %v257 = vrcp.pop 32.0
    %v258 = vmul.f32 32.0, %v257
    %v259 = vsub.f32 1.0, %v258
    %v260 = vmul.f32 %v257, %v259
    %v261 = vadd.f32 %v257, %v260
    %vm262 = vweird.f32 %v257
    %v263 = vsel %vm262, %v257, %v261
    %v264 = vmul.f32 %v253, %v263
    %v265 = vmul.f32 %v256, %v263
    %v266 = vadd.f32 %v264, 1e-05
    %v267 = vadd.f32 %v265, 1e-05
    %v268 = vrsqrt.pop %v266
    %v269 = vmul.f32 %v268, %v266
    %v270 = vmul.f32 %v269, %v268
    %v271 = vmul.f32 0.5, %v270
    %v272 = vsub.f32 1.5, %v271
    %v273 = vmul.f32 %v268, %v272
    %vm274 = vweird.f32 %v266
    %vm275 = vweird.f32 %v268
    %vm276 = vmor %vm274, %vm275
    %v277 = vsel %vm276, %v268, %v273
    %v278 = vrsqrt.pop %v267
    %v279 = vmul.f32 %v278, %v267
    %v280 = vmul.f32 %v279, %v278
    %v281 = vmul.f32 0.5, %v280
    %v282 = vsub.f32 1.5, %v281
    %v283 = vmul.f32 %v278, %v282
    %vm284 = vweird.f32 %v267
    %vm285 = vweird.f32 %v278
    %vm286 = vmor %vm284, %vm285
    %v287 = vsel %vm286, %v278, %v283
    %v288 = vmul.f32 %v237, %v277
    %v289 = vmul.f32 %v239, %v287
    %v291 = vperm.slane %v247, 0
    %v293 = vmul.f32 %v288, %v291
    %v294 = vmul.f32 %v289, %v291
    %v295 = vpack.c.bf16 %v294, %v293
    %v296 = vld [vmem:[%s7] sm:$0xff]
    %v297 = vld [vmem:[%s7 + $0x8] sm:$0xff]
    %v298 = vld [vmem:[%s7 + $0x10] sm:$0xff]
    %v299 = vld [vmem:[%s7 + $0x18] sm:$0xff]
    %v300 = vld [vmem:[%s8] sm:$0x3]
    %v302 = vperm.slane %v300, 0
    %v303 = vperm.slane %v300, 1
    %v310 = vunpack.c.l.b16 %v296
    %v311 = vunpack.c.h.b16 %v296
    %v312 = vunpack.c.l.b16 %v297
    %v313 = vunpack.c.h.b16 %v297
    %v314 = vunpack.c.l.b16 %v298
    %v315 = vunpack.c.h.b16 %v298
    %v316 = vunpack.c.l.b16 %v299
    %v317 = vunpack.c.h.b16 %v299
    %v318 = vpack.c.b16 %v312, %v310
    %v319 = vpack.c.b16 %v313, %v311
    %v320 = vpack.c.b16 %v316, %v314
    %v321 = vpack.c.b16 %v317, %v315
    %v327 = vsel %vm250, %v295, 0
    %329 = vmatpush.bf16.msra.mxu0 0
    %330 = vmatpush.bf16.msra.mxu0 0
    %331 = vmatpush.bf16.msra.mxu0 0
    %332 = vmatpush.bf16.msra.mxu0 0
    %333 = vmatpush.bf16.msra.mxu0 0
    %334 = vmatpush.bf16.msra.mxu0 0
    %335 = vmatpush.bf16.msra.mxu0 %v320
    %336 = vmatpush.bf16.msra.mxu0 %v318
    %337 = vmatmul.bf16.gmra.mxu0 %v327
    %v338 = vpop.f32.mrf.mxu0
    %v339 = vadd.f32 %v302, %v338
    %v340 = vpop.f32.mrf.mxu0
    %v341 = vadd.f32 %v302, %v340
    %342 = vdwg.mxu0
    %343 = vmatpush.bf16.msra.mxu0 0
    %344 = vmatpush.bf16.msra.mxu0 0
    %345 = vmatpush.bf16.msra.mxu0 0
    %346 = vmatpush.bf16.msra.mxu0 0
    %347 = vmatpush.bf16.msra.mxu0 0
    %348 = vmatpush.bf16.msra.mxu0 0
    %349 = vmatpush.bf16.msra.mxu0 %v321
    %350 = vmatpush.bf16.msra.mxu0 %v319
    %351 = vmatmul.bf16.gmra.mxu0 %v327
    %v352 = vpop.f32.mrf.mxu0
    %v353 = vadd.f32 %v303, %v352
    %v354 = vpop.f32.mrf.mxu0
    %v355 = vadd.f32 %v303, %v354
    %356 = vdwg.mxu0
    %v357 = vpack.c.bf16 %v353, %v353
    %v358 = vpack.c.bf16 %v355, %v355
    %v359 = vmul.f32 %v339, %v241
    %v360 = vmul.f32 %v341, %v242
    %363 = vrot.lane.b32.xlu0 %v243, 64
    %v364 = vpop.permute.xlu0 %363
    %365 = vrot.lane.b32.xlu0 %v244, 64
    %v366 = vpop.permute.xlu0 %365
    %v369 = vmul.f32 %v339, %v364
    %v370 = vmul.f32 %v341, %v366
    %373 = vrot.lane.b32.xlu0 %v369, 64
    %v374 = vpop.permute.xlu0 %373
    %375 = vrot.lane.b32.xlu0 %v370, 64
    %v376 = vpop.permute.xlu0 %375
    %v379 = vadd.f32 %v359, %v374
    %v380 = vadd.f32 %v360, %v376
    %v381 = vpack.c.bf16 %v379, %v379
    %v382 = vpack.c.bf16 %v380, %v380
    %385 = vrot.lane.b32.xlu0 %v241, 32
    %v386 = vpop.permute.xlu0 %385
    %387 = vrot.lane.b32.xlu0 %v242, 32
    %v388 = vpop.permute.xlu0 %387
    %v391 = vmul.f32 %v339, %v386
    %v392 = vmul.f32 %v341, %v388
    %393 = vrot.lane.b32.xlu0 %v243, 96
    %v394 = vpop.permute.xlu0 %393
    %395 = vrot.lane.b32.xlu0 %v244, 96
    %v396 = vpop.permute.xlu0 %395
    %v399 = vmul.f32 %v339, %v394
    %v400 = vmul.f32 %v341, %v396
    %403 = vrot.lane.b32.xlu0 %v399, 64
    %v404 = vpop.permute.xlu0 %403
    %405 = vrot.lane.b32.xlu0 %v400, 64
    %v406 = vpop.permute.xlu0 %405
    %v409 = vadd.f32 %v391, %v404
    %v410 = vadd.f32 %v392, %v406
    %v411 = vpack.c.bf16 %v409, %v409
    %v412 = vpack.c.bf16 %v410, %v410
    %v415 = vunpack.c.l.b16 %v381
    %v416 = vunpack.c.l.b16 %v382
    %v417 = vpack.c.b16 %v416, %v415
    %v420 = vunpack.c.l.b16 %v411
    %v421 = vunpack.c.l.b16 %v412
    %v422 = vpack.c.b16 %v421, %v420
    %423 = vrot.lane.b32.xlu0 %v422, 96
    %v424 = vpop.permute.xlu0 %423
    %vm425 = vcmask 64512
    %v427 = vsel %vm425, %v417, 0
    %v430 = vsel %vm425, %v424, 0
    %432 = vmatpush.bf16.xpose.msra.mxu0 0
    %433 = vmatpush.bf16.xpose.msra.mxu0 0
    %434 = vmatpush.bf16.xpose.msra.mxu0 0
    %435 = vmatpush.bf16.xpose.msra.mxu0 0
    %436 = vmatpush.bf16.xpose.msra.mxu0 0
    %437 = vmatpush.bf16.xpose.msra.mxu0 0
    %438 = vmatpush.bf16.xpose.msra.mxu0 0
    %439 = vmatpush.bf16.xpose.msra.mxu0 %v430
    %440 = vmatmul.bf16.gmra.mxu0 %v427
    %v441 = vpop.f32.mrf.mxu0
    %v442 = vadd.f32 0.0, %v441
    %v443 = vpop.f32.mrf.mxu0
    %v444 = vadd.f32 0.0, %v443
    %445 = vdwg.mxu0
    %v446 = vmul.f32 %v442, 0.35355338
    %v447 = vmul.f32 %v444, 0.35355338
    %v448 = vadd.f32 %v446, %v245
    %v449 = vadd.f32 %v447, %v246
    %v450 = vsel %vm223, %v448, -inf
    %451 = vmax.xlane.f32.xlu0 %v450
    %v452 = vpop.xlane.xlu0 %451
    %v453 = vsel %vm223, %v449, -inf
    %454 = vmax.xlane.f32.xlu0 %v453
    %v455 = vpop.xlane.xlu0 %454
    %v456 = vsub.f32 %v448, %v452
    %v457 = vsub.f32 %v449, %v455
    %v458 = vmul.f32 %v456, 1.442695
    %v459 = vpow.pop %v458
    %v460 = vmul.f32 %v457, 1.442695
    %v461 = vpow.pop %v460
    %v462 = vsel %vm223, %v459, 0.0
    %463 = vadd.xlane.f32.xlu0 %v462
    %v464 = vpop.xlane.xlu0 %463
    %v465 = vsel %vm223, %v461, 0.0
    %466 = vadd.xlane.f32.xlu0 %v465
    %v467 = vpop.xlane.xlu0 %466
    %v468 = vrcp.pop %v464
    %v469 = vmul.f32 %v464, %v468
    %v470 = vsub.f32 1.0, %v469
    %v471 = vmul.f32 %v468, %v470
    %v472 = vadd.f32 %v468, %v471
    %vm473 = vweird.f32 %v464
    %vm474 = vweird.f32 %v468
    %vm475 = vmor %vm473, %vm474
    %v476 = vsel %vm475, %v468, %v472
    %v477 = vand.u32 2147483647, %v464
    %vm478 = vcmp.eq.f32.partialorder %v477, 8.507059e+37
    %v479 = vand.u32 %v464, 2147483648
    %v480 = vor.u32 1.1754944e-38, %v479
    %v481 = vsel %vm478, %v480, %v476
    %v482 = vmul.f32 %v459, %v481
    %v483 = vrcp.pop %v467
    %v484 = vmul.f32 %v467, %v483
    %v485 = vsub.f32 1.0, %v484
    %v486 = vmul.f32 %v483, %v485
    %v487 = vadd.f32 %v483, %v486
    %vm488 = vweird.f32 %v467
    %vm489 = vweird.f32 %v483
    %vm490 = vmor %vm488, %vm489
    %v491 = vsel %vm490, %v483, %v487
    %v492 = vand.u32 2147483647, %v467
    %vm493 = vcmp.eq.f32.partialorder %v492, 8.507059e+37
    %v494 = vand.u32 %v467, 2147483648
    %v495 = vor.u32 1.1754944e-38, %v494
    %v496 = vsel %vm493, %v495, %v491
    %v497 = vmul.f32 %v461, %v496
    %v498 = vpack.c.bf16 %v497, %v482
    %v501 = vunpack.c.l.b16 %v357
    %v502 = vunpack.c.l.b16 %v358
    %v503 = vpack.c.b16 %v502, %v501
    %v506 = vsel %vm223, %v498, 0
    %508 = vmatpush.bf16.msra.mxu0 0
    %509 = vmatpush.bf16.msra.mxu0 0
    %510 = vmatpush.bf16.msra.mxu0 0
    %511 = vmatpush.bf16.msra.mxu0 0
    %512 = vmatpush.bf16.msra.mxu0 0
    %513 = vmatpush.bf16.msra.mxu0 0
    %514 = vmatpush.bf16.msra.mxu0 0
    %515 = vmatpush.bf16.msra.mxu0 %v503
    %516 = vmatmul.bf16.gmra.mxu0 %v506
    %v517 = vpop.f32.mrf.mxu0
    %v518 = vadd.f32 0.0, %v517
    %v519 = vpop.f32.mrf.mxu0
    %v520 = vadd.f32 0.0, %v519
    %521 = vdwg.mxu0
    %522 = vrot.lane.b32.xlu0 %v417, 120
    %v523 = vpop.permute.xlu0 %522
    %524 = vrot.lane.b32.xlu0 %v422, 88
    %v525 = vpop.permute.xlu0 %524
    %v527 = vsel %vm425, %v523, 0
    %v530 = vsel %vm425, %v525, 0
    %532 = vmatpush.bf16.xpose.msra.mxu0 0
    %533 = vmatpush.bf16.xpose.msra.mxu0 0
    %534 = vmatpush.bf16.xpose.msra.mxu0 0
    %535 = vmatpush.bf16.xpose.msra.mxu0 0
    %536 = vmatpush.bf16.xpose.msra.mxu0 0
    %537 = vmatpush.bf16.xpose.msra.mxu0 0
    %538 = vmatpush.bf16.xpose.msra.mxu0 0
    %539 = vmatpush.bf16.xpose.msra.mxu0 %v530
    %540 = vmatmul.bf16.gmra.mxu0 %v527
    %v541 = vpop.f32.mrf.mxu0
    %v542 = vadd.f32 0.0, %v541
    %v543 = vpop.f32.mrf.mxu0
    %v544 = vadd.f32 0.0, %v543
    %545 = vdwg.mxu0
    %v546 = vmul.f32 %v542, 0.35355338
    %v547 = vmul.f32 %v544, 0.35355338
    %v548 = vadd.f32 %v546, %v245
    %v549 = vadd.f32 %v547, %v246
    %v550 = vsel %vm223, %v548, -inf
    %551 = vmax.xlane.f32.xlu0 %v550
    %v552 = vpop.xlane.xlu0 %551
    %v553 = vsel %vm223, %v549, -inf
    %554 = vmax.xlane.f32.xlu0 %v553
    %v555 = vpop.xlane.xlu0 %554
    %v556 = vsub.f32 %v548, %v552
    %v557 = vsub.f32 %v549, %v555
    %v558 = vmul.f32 %v556, 1.442695
    %v559 = vpow.pop %v558
    %v560 = vmul.f32 %v557, 1.442695
    %v561 = vpow.pop %v560
    %v562 = vsel %vm223, %v559, 0.0
    %563 = vadd.xlane.f32.xlu0 %v562
    %v564 = vpop.xlane.xlu0 %563
    %v565 = vsel %vm223, %v561, 0.0
    %566 = vadd.xlane.f32.xlu0 %v565
    %v567 = vpop.xlane.xlu0 %566
    %v568 = vrcp.pop %v564
    %v569 = vmul.f32 %v564, %v568
    %v570 = vsub.f32 1.0, %v569
    %v571 = vmul.f32 %v568, %v570
    %v572 = vadd.f32 %v568, %v571
    %vm573 = vweird.f32 %v564
    %vm574 = vweird.f32 %v568
    %vm575 = vmor %vm573, %vm574
    %v576 = vsel %vm575, %v568, %v572
    %v577 = vand.u32 2147483647, %v564
    %vm578 = vcmp.eq.f32.partialorder %v577, 8.507059e+37
    %v579 = vand.u32 %v564, 2147483648
    %v580 = vor.u32 1.1754944e-38, %v579
    %v581 = vsel %vm578, %v580, %v576
    %v582 = vmul.f32 %v559, %v581
    %v583 = vrcp.pop %v567
    %v584 = vmul.f32 %v567, %v583
    %v585 = vsub.f32 1.0, %v584
    %v586 = vmul.f32 %v583, %v585
    %v587 = vadd.f32 %v583, %v586
    %vm588 = vweird.f32 %v567
    %vm589 = vweird.f32 %v583
    %vm590 = vmor %vm588, %vm589
    %v591 = vsel %vm590, %v583, %v587
    %v592 = vand.u32 2147483647, %v567
    %vm593 = vcmp.eq.f32.partialorder %v592, 8.507059e+37
    %v594 = vand.u32 %v567, 2147483648
    %v595 = vor.u32 1.1754944e-38, %v594
    %v596 = vsel %vm593, %v595, %v591
    %v597 = vmul.f32 %v561, %v596
    %v598 = vpack.c.bf16 %v597, %v582
    %599 = vrot.lane.b32.xlu0 %v503, 120
    %v600 = vpop.permute.xlu0 %599
    %v603 = vsel %vm223, %v598, 0
    %605 = vmatpush.bf16.msra.mxu0 0
    %606 = vmatpush.bf16.msra.mxu0 0
    %607 = vmatpush.bf16.msra.mxu0 0
    %608 = vmatpush.bf16.msra.mxu0 0
    %609 = vmatpush.bf16.msra.mxu0 0
    %610 = vmatpush.bf16.msra.mxu0 0
    %611 = vmatpush.bf16.msra.mxu0 0
    %612 = vmatpush.bf16.msra.mxu0 %v600
    %613 = vmatmul.bf16.gmra.mxu0 %v603
    %v614 = vpop.f32.mrf.mxu0
    %v615 = vadd.f32 0.0, %v614
    %v616 = vpop.f32.mrf.mxu0
    %v617 = vadd.f32 0.0, %v616
    %618 = vdwg.mxu0
    %619 = vrot.lane.b32.xlu0 %v417, 112
    %v620 = vpop.permute.xlu0 %619
    %621 = vrot.lane.b32.xlu0 %v422, 80
    %v622 = vpop.permute.xlu0 %621
    %v624 = vsel %vm425, %v620, 0
    %v627 = vsel %vm425, %v622, 0
    %629 = vmatpush.bf16.xpose.msra.mxu0 0
    %630 = vmatpush.bf16.xpose.msra.mxu0 0
    %631 = vmatpush.bf16.xpose.msra.mxu0 0
    %632 = vmatpush.bf16.xpose.msra.mxu0 0
    %633 = vmatpush.bf16.xpose.msra.mxu0 0
    %634 = vmatpush.bf16.xpose.msra.mxu0 0
    %635 = vmatpush.bf16.xpose.msra.mxu0 0
    %636 = vmatpush.bf16.xpose.msra.mxu0 %v627
    %637 = vmatmul.bf16.gmra.mxu0 %v624
    %v638 = vpop.f32.mrf.mxu0
    %v639 = vadd.f32 0.0, %v638
    %v640 = vpop.f32.mrf.mxu0
    %v641 = vadd.f32 0.0, %v640
    %642 = vdwg.mxu0
    %v643 = vmul.f32 %v639, 0.35355338
    %v644 = vmul.f32 %v641, 0.35355338
    %v645 = vadd.f32 %v643, %v245
    %v646 = vadd.f32 %v644, %v246
    %v647 = vsel %vm223, %v645, -inf
    %648 = vmax.xlane.f32.xlu0 %v647
    %v649 = vpop.xlane.xlu0 %648
    %v650 = vsel %vm223, %v646, -inf
    %651 = vmax.xlane.f32.xlu0 %v650
    %v652 = vpop.xlane.xlu0 %651
    %v653 = vsub.f32 %v645, %v649
    %v654 = vsub.f32 %v646, %v652
    %v655 = vmul.f32 %v653, 1.442695
    %v656 = vpow.pop %v655
    %v657 = vmul.f32 %v654, 1.442695
    %v658 = vpow.pop %v657
    %v659 = vsel %vm223, %v656, 0.0
    %660 = vadd.xlane.f32.xlu0 %v659
    %v661 = vpop.xlane.xlu0 %660
    %v662 = vsel %vm223, %v658, 0.0
    %663 = vadd.xlane.f32.xlu0 %v662
    %v664 = vpop.xlane.xlu0 %663
    %v665 = vrcp.pop %v661
    %v666 = vmul.f32 %v661, %v665
    %v667 = vsub.f32 1.0, %v666
    %v668 = vmul.f32 %v665, %v667
    %v669 = vadd.f32 %v665, %v668
    %vm670 = vweird.f32 %v661
    %vm671 = vweird.f32 %v665
    %vm672 = vmor %vm670, %vm671
    %v673 = vsel %vm672, %v665, %v669
    %v674 = vand.u32 2147483647, %v661
    %vm675 = vcmp.eq.f32.partialorder %v674, 8.507059e+37
    %v676 = vand.u32 %v661, 2147483648
    %v677 = vor.u32 1.1754944e-38, %v676
    %v678 = vsel %vm675, %v677, %v673
    %v679 = vmul.f32 %v656, %v678
    %v680 = vrcp.pop %v664
    %v681 = vmul.f32 %v664, %v680
    %v682 = vsub.f32 1.0, %v681
    %v683 = vmul.f32 %v680, %v682
    %v684 = vadd.f32 %v680, %v683
    %vm685 = vweird.f32 %v664
    %vm686 = vweird.f32 %v680
    %vm687 = vmor %vm685, %vm686
    %v688 = vsel %vm687, %v680, %v684
    %v689 = vand.u32 2147483647, %v664
    %vm690 = vcmp.eq.f32.partialorder %v689, 8.507059e+37
    %v691 = vand.u32 %v664, 2147483648
    %v692 = vor.u32 1.1754944e-38, %v691
    %v693 = vsel %vm690, %v692, %v688
    %v694 = vmul.f32 %v658, %v693
    %v695 = vpack.c.bf16 %v694, %v679
    %696 = vrot.lane.b32.xlu0 %v503, 112
    %v697 = vpop.permute.xlu0 %696
    %v700 = vsel %vm223, %v695, 0
    %702 = vmatpush.bf16.msra.mxu0 0
    %703 = vmatpush.bf16.msra.mxu0 0
    %704 = vmatpush.bf16.msra.mxu0 0
    %705 = vmatpush.bf16.msra.mxu0 0
    %706 = vmatpush.bf16.msra.mxu0 0
    %707 = vmatpush.bf16.msra.mxu0 0
    %708 = vmatpush.bf16.msra.mxu0 0
    %709 = vmatpush.bf16.msra.mxu0 %v697
    %710 = vmatmul.bf16.gmra.mxu0 %v700
    %v711 = vpop.f32.mrf.mxu0
    %v712 = vadd.f32 0.0, %v711
    %v713 = vpop.f32.mrf.mxu0
    %v714 = vadd.f32 0.0, %v713
    %715 = vdwg.mxu0
    %716 = vrot.lane.b32.xlu0 %v417, 104
    %v717 = vpop.permute.xlu0 %716
    %718 = vrot.lane.b32.xlu0 %v422, 72
    %v719 = vpop.permute.xlu0 %718
    %v721 = vsel %vm425, %v717, 0
    %v724 = vsel %vm425, %v719, 0
    %726 = vmatpush.bf16.xpose.msra.mxu0 0
    %727 = vmatpush.bf16.xpose.msra.mxu0 0
    %728 = vmatpush.bf16.xpose.msra.mxu0 0
    %729 = vmatpush.bf16.xpose.msra.mxu0 0
    %730 = vmatpush.bf16.xpose.msra.mxu0 0
    %731 = vmatpush.bf16.xpose.msra.mxu0 0
    %732 = vmatpush.bf16.xpose.msra.mxu0 0
    %733 = vmatpush.bf16.xpose.msra.mxu0 %v724
    %734 = vmatmul.bf16.gmra.mxu0 %v721
    %v735 = vpop.f32.mrf.mxu0
    %v736 = vadd.f32 0.0, %v735
    %v737 = vpop.f32.mrf.mxu0
    %v738 = vadd.f32 0.0, %v737
    %739 = vdwg.mxu0
    %v740 = vmul.f32 %v736, 0.35355338
    %v741 = vmul.f32 %v738, 0.35355338
    %v742 = vadd.f32 %v740, %v245
    %v743 = vadd.f32 %v741, %v246
    %v744 = vsel %vm223, %v742, -inf
    %745 = vmax.xlane.f32.xlu0 %v744
    %v746 = vpop.xlane.xlu0 %745
    %v747 = vsel %vm223, %v743, -inf
    %748 = vmax.xlane.f32.xlu0 %v747
    %v749 = vpop.xlane.xlu0 %748
    %v750 = vsub.f32 %v742, %v746
    %v751 = vsub.f32 %v743, %v749
    %v752 = vmul.f32 %v750, 1.442695
    %v753 = vpow.pop %v752
    %v754 = vmul.f32 %v751, 1.442695
    %v755 = vpow.pop %v754
    %v756 = vsel %vm223, %v753, 0.0
    %757 = vadd.xlane.f32.xlu0 %v756
    %v758 = vpop.xlane.xlu0 %757
    %v759 = vsel %vm223, %v755, 0.0
    %760 = vadd.xlane.f32.xlu0 %v759
    %v761 = vpop.xlane.xlu0 %760
    %v762 = vrcp.pop %v758
    %v763 = vmul.f32 %v758, %v762
    %v764 = vsub.f32 1.0, %v763
    %v765 = vmul.f32 %v762, %v764
    %v766 = vadd.f32 %v762, %v765
    %vm767 = vweird.f32 %v758
    %vm768 = vweird.f32 %v762
    %vm769 = vmor %vm767, %vm768
    %v770 = vsel %vm769, %v762, %v766
    %v771 = vand.u32 2147483647, %v758
    %vm772 = vcmp.eq.f32.partialorder %v771, 8.507059e+37
    %v773 = vand.u32 %v758, 2147483648
    %v774 = vor.u32 1.1754944e-38, %v773
    %v775 = vsel %vm772, %v774, %v770
    %v776 = vmul.f32 %v753, %v775
    %v777 = vrcp.pop %v761
    %v778 = vmul.f32 %v761, %v777
    %v779 = vsub.f32 1.0, %v778
    %v780 = vmul.f32 %v777, %v779
    %v781 = vadd.f32 %v777, %v780
    %vm782 = vweird.f32 %v761
    %vm783 = vweird.f32 %v777
    %vm784 = vmor %vm782, %vm783
    %v785 = vsel %vm784, %v777, %v781
    %v786 = vand.u32 2147483647, %v761
    %vm787 = vcmp.eq.f32.partialorder %v786, 8.507059e+37
    %v788 = vand.u32 %v761, 2147483648
    %v789 = vor.u32 1.1754944e-38, %v788
    %v790 = vsel %vm787, %v789, %v785
    %v791 = vmul.f32 %v755, %v790
    %v792 = vpack.c.bf16 %v791, %v776
    %793 = vrot.lane.b32.xlu0 %v503, 104
    %v794 = vpop.permute.xlu0 %793
    %v797 = vsel %vm223, %v792, 0
    %799 = vmatpush.bf16.msra.mxu0 0
    %800 = vmatpush.bf16.msra.mxu0 0
    %801 = vmatpush.bf16.msra.mxu0 0
    %802 = vmatpush.bf16.msra.mxu0 0
    %803 = vmatpush.bf16.msra.mxu0 0
    %804 = vmatpush.bf16.msra.mxu0 0
    %805 = vmatpush.bf16.msra.mxu0 0
    %806 = vmatpush.bf16.msra.mxu0 %v794
    %807 = vmatmul.bf16.gmra.mxu0 %v797
    %v808 = vpop.f32.mrf.mxu0
    %v809 = vadd.f32 0.0, %v808
    %v810 = vpop.f32.mrf.mxu0
    %v811 = vadd.f32 0.0, %v810
    %812 = vdwg.mxu0
    %815 = vrot.lane.b32.xlu0 %v615, 8
    %v816 = vpop.permute.xlu0 %815
    %817 = vrot.lane.b32.xlu0 %v617, 8
    %v818 = vpop.permute.xlu0 %817
    %823 = vrot.lane.b32.xlu0 %v712, 16
    %v824 = vpop.permute.xlu0 %823
    %825 = vrot.lane.b32.xlu0 %v714, 16
    %v826 = vpop.permute.xlu0 %825
    %831 = vrot.lane.b32.xlu0 %v809, 24
    %v832 = vpop.permute.xlu0 %831
    %833 = vrot.lane.b32.xlu0 %v811, 24
    %v834 = vpop.permute.xlu0 %833
    %v837 = vsel %vm425, %v518, %v816
    %v838 = vsel %vm425, %v520, %v818
    %v839 = vsel %vm223, %v837, %v824
    %v840 = vsel %vm223, %v838, %v826
    %vm841 = vcmask 195584
    %v842 = vsel %vm841, %v839, %v832
    %v843 = vsel %vm841, %v840, %v834
    %v844 = vpack.c.bf16 %v843, %v842
    %v845 = vld [vmem:[%s9] sm:$0xf]
    %v846 = vld [vmem:[%s9 + $0x4] sm:$0xf]
    %v847 = vld [vmem:[%s9 + $0x8] sm:$0xf]
    %v848 = vld [vmem:[%s9 + $0xc] sm:$0xf]
    %v853 = vunpack.c.l.b16 %v845
    %v854 = vunpack.c.l.b16 %v846
    %v855 = vunpack.c.l.b16 %v847
    %v856 = vunpack.c.l.b16 %v848
    %v857 = vpack.c.b16 %v854, %v853
    %v858 = vpack.c.b16 %v856, %v855
    %v862 = vsel %vm250, %v844, 0
    %864 = vmatpush.bf16.msra.mxu0 0
    %865 = vmatpush.bf16.msra.mxu0 0
    %866 = vmatpush.bf16.msra.mxu0 0
    %867 = vmatpush.bf16.msra.mxu0 0
    %868 = vmatpush.bf16.msra.mxu0 0
    %869 = vmatpush.bf16.msra.mxu0 0
    %870 = vmatpush.bf16.msra.mxu0 %v858
    %871 = vmatpush.bf16.msra.mxu0 %v857
    %872 = vmatmul.bf16.gmra.mxu0 %v862
    %v873 = vpop.f32.mrf.mxu0
    %v874 = vadd.f32 0.0, %v873
    %v875 = vpop.f32.mrf.mxu0
    %v876 = vadd.f32 0.0, %v875
    %877 = vdwg.mxu0
    %v878 = vadd.f32 %v237, %v874
    %v879 = vadd.f32 %v239, %v876
    %v880 = vld [vmem:[#allocation13] sm:$0x1]
    %v882 = vperm.slane %v880, 0
    %v884 = vadd.f32 %v878, %v882
    %v885 = vadd.f32 %v879, %v882
    %v886 = vld [vmem:[#allocation14] sm:$0x1]
    %v887 = vmul.f32 %v884, %v884
    %v888 = vmul.f32 %v885, %v885
    %v889 = vsel %vm250, %v887, 0.0
    %890 = vadd.xlane.f32.xlu0 %v889
    %v891 = vpop.xlane.xlu0 %890
    %v892 = vsel %vm250, %v888, 0.0
    %893 = vadd.xlane.f32.xlu0 %v892
    %v894 = vpop.xlane.xlu0 %893
    %v895 = vmul.f32 %v891, %v263
    %v896 = vmul.f32 %v894, %v263
    %v897 = vadd.f32 %v895, 1e-05
    %v898 = vadd.f32 %v896, 1e-05
    %v899 = vrsqrt.pop %v897
    %v900 = vmul.f32 %v899, %v897
    %v901 = vmul.f32 %v900, %v899
    %v902 = vmul.f32 0.5, %v901
    %v903 = vsub.f32 1.5, %v902
    %v904 = vmul.f32 %v899, %v903
    %vm905 = vweird.f32 %v897
    %vm906 = vweird.f32 %v899
    %vm907 = vmor %vm905, %vm906
    %v908 = vsel %vm907, %v899, %v904
    %v909 = vrsqrt.pop %v898
    %v910 = vmul.f32 %v909, %v898
    %v911 = vmul.f32 %v910, %v909
    %v912 = vmul.f32 0.5, %v911
    %v913 = vsub.f32 1.5, %v912
    %v914 = vmul.f32 %v909, %v913
    %vm915 = vweird.f32 %v898
    %vm916 = vweird.f32 %v909
    %vm917 = vmor %vm915, %vm916
    %v918 = vsel %vm917, %v909, %v914
    %v919 = vmul.f32 %v884, %v908
    %v920 = vmul.f32 %v885, %v918
    %v922 = vperm.slane %v886, 0
    %v924 = vmul.f32 %v919, %v922
    %v925 = vmul.f32 %v920, %v922
    %v926 = vpack.c.bf16 %v925, %v924
    %v927 = vld [vmem:[%s12] sm:$0xff]
    %v928 = vld [vmem:[%s12 + $0x8] sm:$0xff]
    %v929 = vld [vmem:[%s12 + $0x10] sm:$0xff]
    %v930 = vld [vmem:[%s12 + $0x18] sm:$0xff]
    %v931 = vld [vmem:[%s13] sm:$0x3]
    %v933 = vperm.slane %v931, 0
    %v934 = vperm.slane %v931, 1
    %v941 = vunpack.c.l.b16 %v927
    %v942 = vunpack.c.h.b16 %v927
    %v943 = vunpack.c.l.b16 %v928
    %v944 = vunpack.c.h.b16 %v928
    %v945 = vunpack.c.l.b16 %v929
    %v946 = vunpack.c.h.b16 %v929
    %v947 = vunpack.c.l.b16 %v930
    %v948 = vunpack.c.h.b16 %v930
    %v949 = vpack.c.b16 %v943, %v941
    %v950 = vpack.c.b16 %v944, %v942
    %v951 = vpack.c.b16 %v947, %v945
    %v952 = vpack.c.b16 %v948, %v946
    %v958 = vsel %vm250, %v926, 0
    %960 = vmatpush.bf16.msra.mxu0 0
    %961 = vmatpush.bf16.msra.mxu0 0
    %962 = vmatpush.bf16.msra.mxu0 0
    %963 = vmatpush.bf16.msra.mxu0 0
    %964 = vmatpush.bf16.msra.mxu0 0
    %965 = vmatpush.bf16.msra.mxu0 0
    %966 = vmatpush.bf16.msra.mxu0 %v951
    %967 = vmatpush.bf16.msra.mxu0 %v949
    %968 = vmatmul.bf16.gmra.mxu0 %v958
    %v969 = vpop.f32.mrf.mxu0
    %v970 = vadd.f32 %v933, %v969
    %v971 = vpop.f32.mrf.mxu0
    %v972 = vadd.f32 %v933, %v971
    %973 = vdwg.mxu0
    %974 = vmatpush.bf16.msra.mxu0 0
    %975 = vmatpush.bf16.msra.mxu0 0
    %976 = vmatpush.bf16.msra.mxu0 0
    %977 = vmatpush.bf16.msra.mxu0 0
    %978 = vmatpush.bf16.msra.mxu0 0
    %979 = vmatpush.bf16.msra.mxu0 0
    %980 = vmatpush.bf16.msra.mxu0 %v952
    %981 = vmatpush.bf16.msra.mxu0 %v950
    %982 = vmatmul.bf16.gmra.mxu0 %v958
    %v983 = vpop.f32.mrf.mxu0
    %v984 = vadd.f32 %v934, %v983
    %v985 = vpop.f32.mrf.mxu0
    %v986 = vadd.f32 %v934, %v985
    %987 = vdwg.mxu0
    %v988 = vxor.u32 %v970, 2147483648
    %v989 = vxor.u32 %v972, 2147483648
    %v990 = vmul.f32 %v988, 1.442695
    %v991 = vpow.pop %v990
    %v992 = vmul.f32 %v989, 1.442695
    %v993 = vpow.pop %v992
    %v994 = vadd.f32 %v991, 1.0
    %v995 = vadd.f32 %v993, 1.0
    %v996 = vrcp.pop %v994
    %v997 = vmul.f32 %v994, %v996
    %v998 = vsub.f32 1.0, %v997
    %v999 = vmul.f32 %v996, %v998
    %v1000 = vadd.f32 %v996, %v999
    %vm1001 = vweird.f32 %v994
    %vm1002 = vweird.f32 %v996
    %vm1003 = vmor %vm1001, %vm1002
    %v1004 = vsel %vm1003, %v996, %v1000
    %v1005 = vand.u32 2147483647, %v994
    %vm1006 = vcmp.eq.f32.partialorder %v1005, 8.507059e+37
    %v1007 = vand.u32 %v994, 2147483648
    %v1008 = vor.u32 1.1754944e-38, %v1007
    %v1009 = vsel %vm1006, %v1008, %v1004
    %v1010 = vmul.f32 1.0, %v1009
    %v1011 = vrcp.pop %v995
    %v1012 = vmul.f32 %v995, %v1011
    %v1013 = vsub.f32 1.0, %v1012
    %v1014 = vmul.f32 %v1011, %v1013
    %v1015 = vadd.f32 %v1011, %v1014
    %vm1016 = vweird.f32 %v995
    %vm1017 = vweird.f32 %v1011
    %vm1018 = vmor %vm1016, %vm1017
    %v1019 = vsel %vm1018, %v1011, %v1015
    %v1020 = vand.u32 2147483647, %v995
    %vm1021 = vcmp.eq.f32.partialorder %v1020, 8.507059e+37
    %v1022 = vand.u32 %v995, 2147483648
    %v1023 = vor.u32 1.1754944e-38, %v1022
    %v1024 = vsel %vm1021, %v1023, %v1019
    %v1025 = vmul.f32 1.0, %v1024
    %v1026 = vmul.f32 %v970, %v1010
    %v1027 = vmul.f32 %v972, %v1025
    %v1028 = vmul.f32 %v1026, %v984
    %v1029 = vmul.f32 %v1027, %v986
    %v1030 = vpack.c.bf16 %v1029, %v1028
    %v1031 = vld [vmem:[%s14] sm:$0xf]
    %v1032 = vld [vmem:[%s14 + $0x4] sm:$0xf]
    %v1033 = vld [vmem:[%s14 + $0x8] sm:$0xf]
    %v1034 = vld [vmem:[%s14 + $0xc] sm:$0xf]
    %v1035 = vld [vmem:[%s14 + $0x10] sm:$0xf]
    %v1036 = vld [vmem:[%s14 + $0x14] sm:$0xf]
    %v1037 = vld [vmem:[%s14 + $0x18] sm:$0xf]
    %v1038 = vld [vmem:[%s14 + $0x1c] sm:$0xf]
    %v1039 = vld [vmem:[%s14 + $0x20] sm:$0xf]
    %v1040 = vld [vmem:[%s14 + $0x24] sm:$0xf]
    %v1041 = vld [vmem:[%s14 + $0x28] sm:$0xf]
    %v1042 = vld [vmem:[%s14 + $0x2c] sm:$0xf]
    %v1043 = vld [vmem:[%s14 + $0x30] sm:$0xf]
    %v1044 = vld [vmem:[%s14 + $0x34] sm:$0xf]
    %v1045 = vld [vmem:[%s14 + $0x38] sm:$0xf]
    %v1046 = vld [vmem:[%s14 + $0x3c] sm:$0xf]
    %v1063 = vunpack.c.l.b16 %v1031
    %v1064 = vunpack.c.l.b16 %v1032
    %v1065 = vunpack.c.l.b16 %v1033
    %v1066 = vunpack.c.l.b16 %v1034
    %v1067 = vunpack.c.l.b16 %v1035
    %v1068 = vunpack.c.l.b16 %v1036
    %v1069 = vunpack.c.l.b16 %v1037
    %v1070 = vunpack.c.l.b16 %v1038
    %v1071 = vunpack.c.l.b16 %v1039
    %v1072 = vunpack.c.l.b16 %v1040
    %v1073 = vunpack.c.l.b16 %v1041
    %v1074 = vunpack.c.l.b16 %v1042
    %v1075 = vunpack.c.l.b16 %v1043
    %v1076 = vunpack.c.l.b16 %v1044
    %v1077 = vunpack.c.l.b16 %v1045
    %v1078 = vunpack.c.l.b16 %v1046
    %v1079 = vpack.c.b16 %v1064, %v1063
    %v1080 = vpack.c.b16 %v1066, %v1065
    %v1081 = vpack.c.b16 %v1068, %v1067
    %v1082 = vpack.c.b16 %v1070, %v1069
    %v1083 = vpack.c.b16 %v1072, %v1071
    %v1084 = vpack.c.b16 %v1074, %v1073
    %v1085 = vpack.c.b16 %v1076, %v1075
    %v1086 = vpack.c.b16 %v1078, %v1077
    %1095 = vmatpush.bf16.msra.mxu0 %v1086
    %1096 = vmatpush.bf16.msra.mxu0 %v1085
    %1097 = vmatpush.bf16.msra.mxu0 %v1084
    %1098 = vmatpush.bf16.msra.mxu0 %v1083
    %1099 = vmatpush.bf16.msra.mxu0 %v1082
    %1100 = vmatpush.bf16.msra.mxu0 %v1081
    %1101 = vmatpush.bf16.msra.mxu0 %v1080
    %1102 = vmatpush.bf16.msra.mxu0 %v1079
    %1103 = vmatmul.bf16.gmra.mxu0 %v1030
    %v1104 = vpop.f32.mrf.mxu0
    %v1105 = vadd.f32 0.0, %v1104
    %v1106 = vpop.f32.mrf.mxu0
    %v1107 = vadd.f32 0.0, %v1106
    %1108 = vdwg.mxu0
    %v1109 = vadd.f32 %v884, %v1105
    %v1110 = vadd.f32 %v885, %v1107
    %v1111 = vld [vmem:[%s15] sm:$0x1]
    %v1113 = vperm.slane %v1111, 0
    %v1115 = vadd.f32 %v1109, %v1113
    %v1116 = vadd.f32 %v1110, %v1113
    %s1117 = scalar_lea.vmem [#allocation11], 1
    %v1118 = vld [vmem:[%s1117] sm:$0x1]
    %v1119 = vmul.f32 %v1115, %v1115
    %v1120 = vmul.f32 %v1116, %v1116
    %v1121 = vsel %vm250, %v1119, 0.0
    %1122 = vadd.xlane.f32.xlu0 %v1121
    %v1123 = vpop.xlane.xlu0 %1122
    %v1124 = vsel %vm250, %v1120, 0.0
    %1125 = vadd.xlane.f32.xlu0 %v1124
    %v1126 = vpop.xlane.xlu0 %1125
    %v1127 = vmul.f32 %v1123, %v263
    %v1128 = vmul.f32 %v1126, %v263
    %v1129 = vadd.f32 %v1127, 1e-05
    %v1130 = vadd.f32 %v1128, 1e-05
    %v1131 = vrsqrt.pop %v1129
    %v1132 = vmul.f32 %v1131, %v1129
    %v1133 = vmul.f32 %v1132, %v1131
    %v1134 = vmul.f32 0.5, %v1133
    %v1135 = vsub.f32 1.5, %v1134
    %v1136 = vmul.f32 %v1131, %v1135
    %vm1137 = vweird.f32 %v1129
    %vm1138 = vweird.f32 %v1131
    %vm1139 = vmor %vm1137, %vm1138
    %v1140 = vsel %vm1139, %v1131, %v1136
    %v1141 = vrsqrt.pop %v1130
    %v1142 = vmul.f32 %v1141, %v1130
    %v1143 = vmul.f32 %v1142, %v1141
    %v1144 = vmul.f32 0.5, %v1143
    %v1145 = vsub.f32 1.5, %v1144
    %v1146 = vmul.f32 %v1141, %v1145
    %vm1147 = vweird.f32 %v1130
    %vm1148 = vweird.f32 %v1141
    %vm1149 = vmor %vm1147, %vm1148
    %v1150 = vsel %vm1149, %v1141, %v1146
    %v1151 = vmul.f32 %v1115, %v1140
    %v1152 = vmul.f32 %v1116, %v1150
    %v1154 = vperm.slane %v1118, 0
    %v1156 = vmul.f32 %v1151, %v1154
    %v1157 = vmul.f32 %v1152, %v1154
    %v1158 = vpack.c.bf16 %v1157, %v1156
    %s1159 = scalar_lea.vmem %s7, 32
    %v1160 = vld [vmem:[%s1159] sm:$0xff]
    %v1161 = vld [vmem:[%s1159 + $0x8] sm:$0xff]
    %v1162 = vld [vmem:[%s1159 + $0x10] sm:$0xff]
    %v1163 = vld [vmem:[%s1159 + $0x18] sm:$0xff]
    %s1164 = scalar_lea.vmem %s8, 2
    %v1165 = vld [vmem:[%s1164] sm:$0x3]
    %v1167 = vperm.slane %v1165, 0
    %v1168 = vperm.slane %v1165, 1
    %v1175 = vunpack.c.l.b16 %v1160
    %v1176 = vunpack.c.h.b16 %v1160
    %v1177 = vunpack.c.l.b16 %v1161
    %v1178 = vunpack.c.h.b16 %v1161
    %v1179 = vunpack.c.l.b16 %v1162
    %v1180 = vunpack.c.h.b16 %v1162
    %v1181 = vunpack.c.l.b16 %v1163
    %v1182 = vunpack.c.h.b16 %v1163
    %v1183 = vpack.c.b16 %v1177, %v1175
    %v1184 = vpack.c.b16 %v1178, %v1176
    %v1185 = vpack.c.b16 %v1181, %v1179
    %v1186 = vpack.c.b16 %v1182, %v1180
    %v1192 = vsel %vm250, %v1158, 0
    %1194 = vmatpush.bf16.msra.mxu0 0
    %1195 = vmatpush.bf16.msra.mxu0 0
    %1196 = vmatpush.bf16.msra.mxu0 0
    %1197 = vmatpush.bf16.msra.mxu0 0
    %1198 = vmatpush.bf16.msra.mxu0 0
    %1199 = vmatpush.bf16.msra.mxu0 0
    %1200 = vmatpush.bf16.msra.mxu0 %v1185
    %1201 = vmatpush.bf16.msra.mxu0 %v1183
    %1202 = vmatmul.bf16.gmra.mxu0 %v1192
    %v1203 = vpop.f32.mrf.mxu0
    %v1204 = vadd.f32 %v1167, %v1203
    %v1205 = vpop.f32.mrf.mxu0
    %v1206 = vadd.f32 %v1167, %v1205
    %1207 = vdwg.mxu0
    %1208 = vmatpush.bf16.msra.mxu0 0
    %1209 = vmatpush.bf16.msra.mxu0 0
    %1210 = vmatpush.bf16.msra.mxu0 0
    %1211 = vmatpush.bf16.msra.mxu0 0
    %1212 = vmatpush.bf16.msra.mxu0 0
    %1213 = vmatpush.bf16.msra.mxu0 0
    %1214 = vmatpush.bf16.msra.mxu0 %v1186
    %1215 = vmatpush.bf16.msra.mxu0 %v1184
    %1216 = vmatmul.bf16.gmra.mxu0 %v1192
    %v1217 = vpop.f32.mrf.mxu0
    %v1218 = vadd.f32 %v1168, %v1217
    %v1219 = vpop.f32.mrf.mxu0
    %v1220 = vadd.f32 %v1168, %v1219
    %1221 = vdwg.mxu0
    %v1222 = vpack.c.bf16 %v1218, %v1218
    %v1223 = vpack.c.bf16 %v1220, %v1220
    %v1224 = vmul.f32 %v1204, %v241
    %v1225 = vmul.f32 %v1206, %v242
    %v1226 = vmul.f32 %v1204, %v364
    %v1227 = vmul.f32 %v1206, %v366
    %1230 = vrot.lane.b32.xlu0 %v1226, 64
    %v1231 = vpop.permute.xlu0 %1230
    %1232 = vrot.lane.b32.xlu0 %v1227, 64
    %v1233 = vpop.permute.xlu0 %1232
    %v1236 = vadd.f32 %v1224, %v1231
    %v1237 = vadd.f32 %v1225, %v1233
    %v1238 = vpack.c.bf16 %v1236, %v1236
    %v1239 = vpack.c.bf16 %v1237, %v1237
    %v1240 = vmul.f32 %v1204, %v386
    %v1241 = vmul.f32 %v1206, %v388
    %v1242 = vmul.f32 %v1204, %v394
    %v1243 = vmul.f32 %v1206, %v396
    %1246 = vrot.lane.b32.xlu0 %v1242, 64
    %v1247 = vpop.permute.xlu0 %1246
    %1248 = vrot.lane.b32.xlu0 %v1243, 64
    %v1249 = vpop.permute.xlu0 %1248
    %v1252 = vadd.f32 %v1240, %v1247
    %v1253 = vadd.f32 %v1241, %v1249
    %v1254 = vpack.c.bf16 %v1252, %v1252
    %v1255 = vpack.c.bf16 %v1253, %v1253
    %v1258 = vunpack.c.l.b16 %v1238
    %v1259 = vunpack.c.l.b16 %v1239
    %v1260 = vpack.c.b16 %v1259, %v1258
    %v1263 = vunpack.c.l.b16 %v1254
    %v1264 = vunpack.c.l.b16 %v1255
    %v1265 = vpack.c.b16 %v1264, %v1263
    %1266 = vrot.lane.b32.xlu0 %v1265, 96
    %v1267 = vpop.permute.xlu0 %1266
    %v1269 = vsel %vm425, %v1260, 0
    %v1272 = vsel %vm425, %v1267, 0
    %1274 = vmatpush.bf16.xpose.msra.mxu0 0
    %1275 = vmatpush.bf16.xpose.msra.mxu0 0
    %1276 = vmatpush.bf16.xpose.msra.mxu0 0
    %1277 = vmatpush.bf16.xpose.msra.mxu0 0
    %1278 = vmatpush.bf16.xpose.msra.mxu0 0
    %1279 = vmatpush.bf16.xpose.msra.mxu0 0
    %1280 = vmatpush.bf16.xpose.msra.mxu0 0
    %1281 = vmatpush.bf16.xpose.msra.mxu0 %v1272
    %1282 = vmatmul.bf16.gmra.mxu0 %v1269
    %v1283 = vpop.f32.mrf.mxu0
    %v1284 = vadd.f32 0.0, %v1283
    %v1285 = vpop.f32.mrf.mxu0
    %v1286 = vadd.f32 0.0, %v1285
    %1287 = vdwg.mxu0
    %v1288 = vmul.f32 %v1284, 0.35355338
    %v1289 = vmul.f32 %v1286, 0.35355338
    %v1290 = vadd.f32 %v1288, %v245
    %v1291 = vadd.f32 %v1289, %v246
    %v1292 = vsel %vm223, %v1290, -inf
    %1293 = vmax.xlane.f32.xlu0 %v1292
    %v1294 = vpop.xlane.xlu0 %1293
    %v1295 = vsel %vm223, %v1291, -inf
    %1296 = vmax.xlane.f32.xlu0 %v1295
    %v1297 = vpop.xlane.xlu0 %1296
    %v1298 = vsub.f32 %v1290, %v1294
    %v1299 = vsub.f32 %v1291, %v1297
    %v1300 = vmul.f32 %v1298, 1.442695
    %v1301 = vpow.pop %v1300
    %v1302 = vmul.f32 %v1299, 1.442695
    %v1303 = vpow.pop %v1302
    %v1304 = vsel %vm223, %v1301, 0.0
    %1305 = vadd.xlane.f32.xlu0 %v1304
    %v1306 = vpop.xlane.xlu0 %1305
    %v1307 = vsel %vm223, %v1303, 0.0
    %1308 = vadd.xlane.f32.xlu0 %v1307
    %v1309 = vpop.xlane.xlu0 %1308
    %v1310 = vrcp.pop %v1306
    %v1311 = vmul.f32 %v1306, %v1310
    %v1312 = vsub.f32 1.0, %v1311
    %v1313 = vmul.f32 %v1310, %v1312
    %v1314 = vadd.f32 %v1310, %v1313
    %vm1315 = vweird.f32 %v1306
    %vm1316 = vweird.f32 %v1310
    %vm1317 = vmor %vm1315, %vm1316
    %v1318 = vsel %vm1317, %v1310, %v1314
    %v1319 = vand.u32 2147483647, %v1306
    %vm1320 = vcmp.eq.f32.partialorder %v1319, 8.507059e+37
    %v1321 = vand.u32 %v1306, 2147483648
    %v1322 = vor.u32 1.1754944e-38, %v1321
    %v1323 = vsel %vm1320, %v1322, %v1318
    %v1324 = vmul.f32 %v1301, %v1323
    %v1325 = vrcp.pop %v1309
    %v1326 = vmul.f32 %v1309, %v1325
    %v1327 = vsub.f32 1.0, %v1326
    %v1328 = vmul.f32 %v1325, %v1327
    %v1329 = vadd.f32 %v1325, %v1328
    %vm1330 = vweird.f32 %v1309
    %vm1331 = vweird.f32 %v1325
    %vm1332 = vmor %vm1330, %vm1331
    %v1333 = vsel %vm1332, %v1325, %v1329
    %v1334 = vand.u32 2147483647, %v1309
    %vm1335 = vcmp.eq.f32.partialorder %v1334, 8.507059e+37
    %v1336 = vand.u32 %v1309, 2147483648
    %v1337 = vor.u32 1.1754944e-38, %v1336
    %v1338 = vsel %vm1335, %v1337, %v1333
    %v1339 = vmul.f32 %v1303, %v1338
    %v1340 = vpack.c.bf16 %v1339, %v1324
    %v1343 = vunpack.c.l.b16 %v1222
    %v1344 = vunpack.c.l.b16 %v1223
    %v1345 = vpack.c.b16 %v1344, %v1343
    %v1348 = vsel %vm223, %v1340, 0
    %1350 = vmatpush.bf16.msra.mxu0 0
    %1351 = vmatpush.bf16.msra.mxu0 0
    %1352 = vmatpush.bf16.msra.mxu0 0
    %1353 = vmatpush.bf16.msra.mxu0 0
    %1354 = vmatpush.bf16.msra.mxu0 0
    %1355 = vmatpush.bf16.msra.mxu0 0
    %1356 = vmatpush.bf16.msra.mxu0 0
    %1357 = vmatpush.bf16.msra.mxu0 %v1345
    %1358 = vmatmul.bf16.gmra.mxu0 %v1348
    %v1359 = vpop.f32.mrf.mxu0
    %v1360 = vadd.f32 0.0, %v1359
    %v1361 = vpop.f32.mrf.mxu0
    %v1362 = vadd.f32 0.0, %v1361
    %1363 = vdwg.mxu0
    %1364 = vrot.lane.b32.xlu0 %v1260, 120
    %v1365 = vpop.permute.xlu0 %1364
    %1366 = vrot.lane.b32.xlu0 %v1265, 88
    %v1367 = vpop.permute.xlu0 %1366
    %v1369 = vsel %vm425, %v1365, 0
    %v1372 = vsel %vm425, %v1367, 0
    %1374 = vmatpush.bf16.xpose.msra.mxu0 0
    %1375 = vmatpush.bf16.xpose.msra.mxu0 0
    %1376 = vmatpush.bf16.xpose.msra.mxu0 0
    %1377 = vmatpush.bf16.xpose.msra.mxu0 0
    %1378 = vmatpush.bf16.xpose.msra.mxu0 0
    %1379 = vmatpush.bf16.xpose.msra.mxu0 0
    %1380 = vmatpush.bf16.xpose.msra.mxu0 0
    %1381 = vmatpush.bf16.xpose.msra.mxu0 %v1372
    %1382 = vmatmul.bf16.gmra.mxu0 %v1369
    %v1383 = vpop.f32.mrf.mxu0
    %v1384 = vadd.f32 0.0, %v1383
    %v1385 = vpop.f32.mrf.mxu0
    %v1386 = vadd.f32 0.0, %v1385
    %1387 = vdwg.mxu0
    %v1388 = vmul.f32 %v1384, 0.35355338
    %v1389 = vmul.f32 %v1386, 0.35355338
    %v1390 = vadd.f32 %v1388, %v245
    %v1391 = vadd.f32 %v1389, %v246
    %v1392 = vsel %vm223, %v1390, -inf
    %1393 = vmax.xlane.f32.xlu0 %v1392
    %v1394 = vpop.xlane.xlu0 %1393
    %v1395 = vsel %vm223, %v1391, -inf
    %1396 = vmax.xlane.f32.xlu0 %v1395
    %v1397 = vpop.xlane.xlu0 %1396
    %v1398 = vsub.f32 %v1390, %v1394
    %v1399 = vsub.f32 %v1391, %v1397
    %v1400 = vmul.f32 %v1398, 1.442695
    %v1401 = vpow.pop %v1400
    %v1402 = vmul.f32 %v1399, 1.442695
    %v1403 = vpow.pop %v1402
    %v1404 = vsel %vm223, %v1401, 0.0
    %1405 = vadd.xlane.f32.xlu0 %v1404
    %v1406 = vpop.xlane.xlu0 %1405
    %v1407 = vsel %vm223, %v1403, 0.0
    %1408 = vadd.xlane.f32.xlu0 %v1407
    %v1409 = vpop.xlane.xlu0 %1408
    %v1410 = vrcp.pop %v1406
    %v1411 = vmul.f32 %v1406, %v1410
    %v1412 = vsub.f32 1.0, %v1411
    %v1413 = vmul.f32 %v1410, %v1412
    %v1414 = vadd.f32 %v1410, %v1413
    %vm1415 = vweird.f32 %v1406
    %vm1416 = vweird.f32 %v1410
    %vm1417 = vmor %vm1415, %vm1416
    %v1418 = vsel %vm1417, %v1410, %v1414
    %v1419 = vand.u32 2147483647, %v1406
    %vm1420 = vcmp.eq.f32.partialorder %v1419, 8.507059e+37
    %v1421 = vand.u32 %v1406, 2147483648
    %v1422 = vor.u32 1.1754944e-38, %v1421
    %v1423 = vsel %vm1420, %v1422, %v1418
    %v1424 = vmul.f32 %v1401, %v1423
    %v1425 = vrcp.pop %v1409
    %v1426 = vmul.f32 %v1409, %v1425
    %v1427 = vsub.f32 1.0, %v1426
    %v1428 = vmul.f32 %v1425, %v1427
    %v1429 = vadd.f32 %v1425, %v1428
    %vm1430 = vweird.f32 %v1409
    %vm1431 = vweird.f32 %v1425
    %vm1432 = vmor %vm1430, %vm1431
    %v1433 = vsel %vm1432, %v1425, %v1429
    %v1434 = vand.u32 2147483647, %v1409
    %vm1435 = vcmp.eq.f32.partialorder %v1434, 8.507059e+37
    %v1436 = vand.u32 %v1409, 2147483648
    %v1437 = vor.u32 1.1754944e-38, %v1436
    %v1438 = vsel %vm1435, %v1437, %v1433
    %v1439 = vmul.f32 %v1403, %v1438
    %v1440 = vpack.c.bf16 %v1439, %v1424
    %1441 = vrot.lane.b32.xlu0 %v1345, 120
    %v1442 = vpop.permute.xlu0 %1441
    %v1445 = vsel %vm223, %v1440, 0
    %1447 = vmatpush.bf16.msra.mxu0 0
    %1448 = vmatpush.bf16.msra.mxu0 0
    %1449 = vmatpush.bf16.msra.mxu0 0
    %1450 = vmatpush.bf16.msra.mxu0 0
    %1451 = vmatpush.bf16.msra.mxu0 0
    %1452 = vmatpush.bf16.msra.mxu0 0
    %1453 = vmatpush.bf16.msra.mxu0 0
    %1454 = vmatpush.bf16.msra.mxu0 %v1442
    %1455 = vmatmul.bf16.gmra.mxu0 %v1445
    %v1456 = vpop.f32.mrf.mxu0
    %v1457 = vadd.f32 0.0, %v1456
    %v1458 = vpop.f32.mrf.mxu0
    %v1459 = vadd.f32 0.0, %v1458
    %1460 = vdwg.mxu0
    %1461 = vrot.lane.b32.xlu0 %v1260, 112
    %v1462 = vpop.permute.xlu0 %1461
    %1463 = vrot.lane.b32.xlu0 %v1265, 80
    %v1464 = vpop.permute.xlu0 %1463
    %v1466 = vsel %vm425, %v1462, 0
    %v1469 = vsel %vm425, %v1464, 0
    %1471 = vmatpush.bf16.xpose.msra.mxu0 0
    %1472 = vmatpush.bf16.xpose.msra.mxu0 0
    %1473 = vmatpush.bf16.xpose.msra.mxu0 0
    %1474 = vmatpush.bf16.xpose.msra.mxu0 0
    %1475 = vmatpush.bf16.xpose.msra.mxu0 0
    %1476 = vmatpush.bf16.xpose.msra.mxu0 0
    %1477 = vmatpush.bf16.xpose.msra.mxu0 0
    %1478 = vmatpush.bf16.xpose.msra.mxu0 %v1469
    %1479 = vmatmul.bf16.gmra.mxu0 %v1466
    %v1480 = vpop.f32.mrf.mxu0
    %v1481 = vadd.f32 0.0, %v1480
    %v1482 = vpop.f32.mrf.mxu0
    %v1483 = vadd.f32 0.0, %v1482
    %1484 = vdwg.mxu0
    %v1485 = vmul.f32 %v1481, 0.35355338
    %v1486 = vmul.f32 %v1483, 0.35355338
    %v1487 = vadd.f32 %v1485, %v245
    %v1488 = vadd.f32 %v1486, %v246
    %v1489 = vsel %vm223, %v1487, -inf
    %1490 = vmax.xlane.f32.xlu0 %v1489
    %v1491 = vpop.xlane.xlu0 %1490
    %v1492 = vsel %vm223, %v1488, -inf
    %1493 = vmax.xlane.f32.xlu0 %v1492
    %v1494 = vpop.xlane.xlu0 %1493
    %v1495 = vsub.f32 %v1487, %v1491
    %v1496 = vsub.f32 %v1488, %v1494
    %v1497 = vmul.f32 %v1495, 1.442695
    %v1498 = vpow.pop %v1497
    %v1499 = vmul.f32 %v1496, 1.442695
    %v1500 = vpow.pop %v1499
    %v1501 = vsel %vm223, %v1498, 0.0
    %1502 = vadd.xlane.f32.xlu0 %v1501
    %v1503 = vpop.xlane.xlu0 %1502
    %v1504 = vsel %vm223, %v1500, 0.0
    %1505 = vadd.xlane.f32.xlu0 %v1504
    %v1506 = vpop.xlane.xlu0 %1505
    %v1507 = vrcp.pop %v1503
    %v1508 = vmul.f32 %v1503, %v1507
    %v1509 = vsub.f32 1.0, %v1508
    %v1510 = vmul.f32 %v1507, %v1509
    %v1511 = vadd.f32 %v1507, %v1510
    %vm1512 = vweird.f32 %v1503
    %vm1513 = vweird.f32 %v1507
    %vm1514 = vmor %vm1512, %vm1513
    %v1515 = vsel %vm1514, %v1507, %v1511
    %v1516 = vand.u32 2147483647, %v1503
    %vm1517 = vcmp.eq.f32.partialorder %v1516, 8.507059e+37
    %v1518 = vand.u32 %v1503, 2147483648
    %v1519 = vor.u32 1.1754944e-38, %v1518
    %v1520 = vsel %vm1517, %v1519, %v1515
    %v1521 = vmul.f32 %v1498, %v1520
    %v1522 = vrcp.pop %v1506
    %v1523 = vmul.f32 %v1506, %v1522
    %v1524 = vsub.f32 1.0, %v1523
    %v1525 = vmul.f32 %v1522, %v1524
    %v1526 = vadd.f32 %v1522, %v1525
    %vm1527 = vweird.f32 %v1506
    %vm1528 = vweird.f32 %v1522
    %vm1529 = vmor %vm1527, %vm1528
    %v1530 = vsel %vm1529, %v1522, %v1526
    %v1531 = vand.u32 2147483647, %v1506
    %vm1532 = vcmp.eq.f32.partialorder %v1531, 8.507059e+37
    %v1533 = vand.u32 %v1506, 2147483648
    %v1534 = vor.u32 1.1754944e-38, %v1533
    %v1535 = vsel %vm1532, %v1534, %v1530
    %v1536 = vmul.f32 %v1500, %v1535
    %v1537 = vpack.c.bf16 %v1536, %v1521
    %1538 = vrot.lane.b32.xlu0 %v1345, 112
    %v1539 = vpop.permute.xlu0 %1538
    %v1542 = vsel %vm223, %v1537, 0
    %1544 = vmatpush.bf16.msra.mxu0 0
    %1545 = vmatpush.bf16.msra.mxu0 0
    %1546 = vmatpush.bf16.msra.mxu0 0
    %1547 = vmatpush.bf16.msra.mxu0 0
    %1548 = vmatpush.bf16.msra.mxu0 0
    %1549 = vmatpush.bf16.msra.mxu0 0
    %1550 = vmatpush.bf16.msra.mxu0 0
    %1551 = vmatpush.bf16.msra.mxu0 %v1539
    %1552 = vmatmul.bf16.gmra.mxu0 %v1542
    %v1553 = vpop.f32.mrf.mxu0
    %v1554 = vadd.f32 0.0, %v1553
    %v1555 = vpop.f32.mrf.mxu0
    %v1556 = vadd.f32 0.0, %v1555
    %1557 = vdwg.mxu0
    %1558 = vrot.lane.b32.xlu0 %v1260, 104
    %v1559 = vpop.permute.xlu0 %1558
    %1560 = vrot.lane.b32.xlu0 %v1265, 72
    %v1561 = vpop.permute.xlu0 %1560
    %v1563 = vsel %vm425, %v1559, 0
    %v1566 = vsel %vm425, %v1561, 0
    %1568 = vmatpush.bf16.xpose.msra.mxu0 0
    %1569 = vmatpush.bf16.xpose.msra.mxu0 0
    %1570 = vmatpush.bf16.xpose.msra.mxu0 0
    %1571 = vmatpush.bf16.xpose.msra.mxu0 0
    %1572 = vmatpush.bf16.xpose.msra.mxu0 0
    %1573 = vmatpush.bf16.xpose.msra.mxu0 0
    %1574 = vmatpush.bf16.xpose.msra.mxu0 0
    %1575 = vmatpush.bf16.xpose.msra.mxu0 %v1566
    %1576 = vmatmul.bf16.gmra.mxu0 %v1563
    %v1577 = vpop.f32.mrf.mxu0
    %v1578 = vadd.f32 0.0, %v1577
    %v1579 = vpop.f32.mrf.mxu0
    %v1580 = vadd.f32 0.0, %v1579
    %1581 = vdwg.mxu0
    %v1582 = vmul.f32 %v1578, 0.35355338
    %v1583 = vmul.f32 %v1580, 0.35355338
    %v1584 = vadd.f32 %v1582, %v245
    %v1585 = vadd.f32 %v1583, %v246
    %v1586 = vsel %vm223, %v1584, -inf
    %1587 = vmax.xlane.f32.xlu0 %v1586
    %v1588 = vpop.xlane.xlu0 %1587
    %v1589 = vsel %vm223, %v1585, -inf
    %1590 = vmax.xlane.f32.xlu0 %v1589
    %v1591 = vpop.xlane.xlu0 %1590
    %v1592 = vsub.f32 %v1584, %v1588
    %v1593 = vsub.f32 %v1585, %v1591
    %v1594 = vmul.f32 %v1592, 1.442695
    %v1595 = vpow.pop %v1594
    %v1596 = vmul.f32 %v1593, 1.442695
    %v1597 = vpow.pop %v1596
    %v1598 = vsel %vm223, %v1595, 0.0
    %1599 = vadd.xlane.f32.xlu0 %v1598
    %v1600 = vpop.xlane.xlu0 %1599
    %v1601 = vsel %vm223, %v1597, 0.0
    %1602 = vadd.xlane.f32.xlu0 %v1601
    %v1603 = vpop.xlane.xlu0 %1602
    %v1604 = vrcp.pop %v1600
    %v1605 = vmul.f32 %v1600, %v1604
    %v1606 = vsub.f32 1.0, %v1605
    %v1607 = vmul.f32 %v1604, %v1606
    %v1608 = vadd.f32 %v1604, %v1607
    %vm1609 = vweird.f32 %v1600
    %vm1610 = vweird.f32 %v1604
    %vm1611 = vmor %vm1609, %vm1610
    %v1612 = vsel %vm1611, %v1604, %v1608
    %v1613 = vand.u32 2147483647, %v1600
    %vm1614 = vcmp.eq.f32.partialorder %v1613, 8.507059e+37
    %v1615 = vand.u32 %v1600, 2147483648
    %v1616 = vor.u32 1.1754944e-38, %v1615
    %v1617 = vsel %vm1614, %v1616, %v1612
    %v1618 = vmul.f32 %v1595, %v1617
    %v1619 = vrcp.pop %v1603
    %v1620 = vmul.f32 %v1603, %v1619
    %v1621 = vsub.f32 1.0, %v1620
    %v1622 = vmul.f32 %v1619, %v1621
    %v1623 = vadd.f32 %v1619, %v1622
    %vm1624 = vweird.f32 %v1603
    %vm1625 = vweird.f32 %v1619
    %vm1626 = vmor %vm1624, %vm1625
    %v1627 = vsel %vm1626, %v1619, %v1623
    %v1628 = vand.u32 2147483647, %v1603
    %vm1629 = vcmp.eq.f32.partialorder %v1628, 8.507059e+37
    %v1630 = vand.u32 %v1603, 2147483648
    %v1631 = vor.u32 1.1754944e-38, %v1630
    %v1632 = vsel %vm1629, %v1631, %v1627
    %v1633 = vmul.f32 %v1597, %v1632
    %v1634 = vpack.c.bf16 %v1633, %v1618
    %1635 = vrot.lane.b32.xlu0 %v1345, 104
    %v1636 = vpop.permute.xlu0 %1635
    %v1639 = vsel %vm223, %v1634, 0
    %1641 = vmatpush.bf16.msra.mxu0 0
    %1642 = vmatpush.bf16.msra.mxu0 0
    %1643 = vmatpush.bf16.msra.mxu0 0
    %1644 = vmatpush.bf16.msra.mxu0 0
    %1645 = vmatpush.bf16.msra.mxu0 0
    %1646 = vmatpush.bf16.msra.mxu0 0
    %1647 = vmatpush.bf16.msra.mxu0 0
    %1648 = vmatpush.bf16.msra.mxu0 %v1636
    %1649 = vmatmul.bf16.gmra.mxu0 %v1639
    %v1650 = vpop.f32.mrf.mxu0
    %v1651 = vadd.f32 0.0, %v1650
    %v1652 = vpop.f32.mrf.mxu0
    %v1653 = vadd.f32 0.0, %v1652
    %1654 = vdwg.mxu0
    %1657 = vrot.lane.b32.xlu0 %v1457, 8
    %v1658 = vpop.permute.xlu0 %1657
    %1659 = vrot.lane.b32.xlu0 %v1459, 8
    %v1660 = vpop.permute.xlu0 %1659
    %1665 = vrot.lane.b32.xlu0 %v1554, 16
    %v1666 = vpop.permute.xlu0 %1665
    %1667 = vrot.lane.b32.xlu0 %v1556, 16
    %v1668 = vpop.permute.xlu0 %1667
    %1673 = vrot.lane.b32.xlu0 %v1651, 24
    %v1674 = vpop.permute.xlu0 %1673
    %1675 = vrot.lane.b32.xlu0 %v1653, 24
    %v1676 = vpop.permute.xlu0 %1675
    %v1679 = vsel %vm425, %v1360, %v1658
    %v1680 = vsel %vm425, %v1362, %v1660
    %v1681 = vsel %vm223, %v1679, %v1666
    %v1682 = vsel %vm223, %v1680, %v1668
    %v1683 = vsel %vm841, %v1681, %v1674
    %v1684 = vsel %vm841, %v1682, %v1676
    %v1685 = vpack.c.bf16 %v1684, %v1683
    %s1686 = scalar_lea.vmem %s9, 16
    %v1687 = vld [vmem:[%s1686] sm:$0xf]
    %v1688 = vld [vmem:[%s1686 + $0x4] sm:$0xf]
    %v1689 = vld [vmem:[%s1686 + $0x8] sm:$0xf]
    %v1690 = vld [vmem:[%s1686 + $0xc] sm:$0xf]
    %v1695 = vunpack.c.l.b16 %v1687
    %v1696 = vunpack.c.l.b16 %v1688
    %v1697 = vunpack.c.l.b16 %v1689
    %v1698 = vunpack.c.l.b16 %v1690
    %v1699 = vpack.c.b16 %v1696, %v1695
    %v1700 = vpack.c.b16 %v1698, %v1697
    %v1704 = vsel %vm250, %v1685, 0
    %1706 = vmatpush.bf16.msra.mxu0 0
    %1707 = vmatpush.bf16.msra.mxu0 0
    %1708 = vmatpush.bf16.msra.mxu0 0
    %1709 = vmatpush.bf16.msra.mxu0 0
    %1710 = vmatpush.bf16.msra.mxu0 0
    %1711 = vmatpush.bf16.msra.mxu0 0
    %1712 = vmatpush.bf16.msra.mxu0 %v1700
    %1713 = vmatpush.bf16.msra.mxu0 %v1699
    %1714 = vmatmul.bf16.gmra.mxu0 %v1704
    %v1715 = vpop.f32.mrf.mxu0
    %v1716 = vadd.f32 0.0, %v1715
    %v1717 = vpop.f32.mrf.mxu0
    %v1718 = vadd.f32 0.0, %v1717
    %1719 = vdwg.mxu0
    %v1720 = vadd.f32 %v1115, %v1716
    %v1721 = vadd.f32 %v1116, %v1718
    %s1722 = scalar_lea.vmem [#allocation13], 1
    %v1723 = vld [vmem:[%s1722] sm:$0x1]
    %v1725 = vperm.slane %v1723, 0
    %v1727 = vadd.f32 %v1720, %v1725
    %v1728 = vadd.f32 %v1721, %v1725
    %s1729 = scalar_lea.vmem [#allocation14], 1
    %v1730 = vld [vmem:[%s1729] sm:$0x1]
    %v1731 = vmul.f32 %v1727, %v1727
    %v1732 = vmul.f32 %v1728, %v1728
    %v1733 = vsel %vm250, %v1731, 0.0
    %1734 = vadd.xlane.f32.xlu0 %v1733
    %v1735 = vpop.xlane.xlu0 %1734
    %v1736 = vsel %vm250, %v1732, 0.0
    %1737 = vadd.xlane.f32.xlu0 %v1736
    %v1738 = vpop.xlane.xlu0 %1737
    %v1739 = vmul.f32 %v1735, %v263
    %v1740 = vmul.f32 %v1738, %v263
    %v1741 = vadd.f32 %v1739, 1e-05
    %v1742 = vadd.f32 %v1740, 1e-05
    %v1743 = vrsqrt.pop %v1741
    %v1744 = vmul.f32 %v1743, %v1741
    %v1745 = vmul.f32 %v1744, %v1743
    %v1746 = vmul.f32 0.5, %v1745
    %v1747 = vsub.f32 1.5, %v1746
    %v1748 = vmul.f32 %v1743, %v1747
    %vm1749 = vweird.f32 %v1741
    %vm1750 = vweird.f32 %v1743
    %vm1751 = vmor %vm1749, %vm1750
    %v1752 = vsel %vm1751, %v1743, %v1748
    %v1753 = vrsqrt.pop %v1742
    %v1754 = vmul.f32 %v1753, %v1742
    %v1755 = vmul.f32 %v1754, %v1753
    %v1756 = vmul.f32 0.5, %v1755
    %v1757 = vsub.f32 1.5, %v1756
    %v1758 = vmul.f32 %v1753, %v1757
    %vm1759 = vweird.f32 %v1742
    %vm1760 = vweird.f32 %v1753
    %vm1761 = vmor %vm1759, %vm1760
    %v1762 = vsel %vm1761, %v1753, %v1758
    %v1763 = vmul.f32 %v1727, %v1752
    %v1764 = vmul.f32 %v1728, %v1762
    %v1766 = vperm.slane %v1730, 0
    %v1768 = vmul.f32 %v1763, %v1766
    %v1769 = vmul.f32 %v1764, %v1766
    %v1770 = vpack.c.bf16 %v1769, %v1768
    %s1771 = scalar_lea.vmem %s12, 32
    %v1772 = vld [vmem:[%s1771] sm:$0xff]
    %v1773 = vld [vmem:[%s1771 + $0x8] sm:$0xff]
    %v1774 = vld [vmem:[%s1771 + $0x10] sm:$0xff]
    %v1775 = vld [vmem:[%s1771 + $0x18] sm:$0xff]
    %s1776 = scalar_lea.vmem %s13, 2
    %v1777 = vld [vmem:[%s1776] sm:$0x3]
    %v1779 = vperm.slane %v1777, 0
    %v1780 = vperm.slane %v1777, 1
    %v1787 = vunpack.c.l.b16 %v1772
    %v1788 = vunpack.c.h.b16 %v1772
    %v1789 = vunpack.c.l.b16 %v1773
    %v1790 = vunpack.c.h.b16 %v1773
    %v1791 = vunpack.c.l.b16 %v1774
    %v1792 = vunpack.c.h.b16 %v1774
    %v1793 = vunpack.c.l.b16 %v1775
    %v1794 = vunpack.c.h.b16 %v1775
    %v1795 = vpack.c.b16 %v1789, %v1787
    %v1796 = vpack.c.b16 %v1790, %v1788
    %v1797 = vpack.c.b16 %v1793, %v1791
    %v1798 = vpack.c.b16 %v1794, %v1792
    %v1804 = vsel %vm250, %v1770, 0
    %1806 = vmatpush.bf16.msra.mxu0 0
    %1807 = vmatpush.bf16.msra.mxu0 0
    %1808 = vmatpush.bf16.msra.mxu0 0
    %1809 = vmatpush.bf16.msra.mxu0 0
    %1810 = vmatpush.bf16.msra.mxu0 0
    %1811 = vmatpush.bf16.msra.mxu0 0
    %1812 = vmatpush.bf16.msra.mxu0 %v1797
    %1813 = vmatpush.bf16.msra.mxu0 %v1795
    %1814 = vmatmul.bf16.gmra.mxu0 %v1804
    %v1815 = vpop.f32.mrf.mxu0
    %v1816 = vadd.f32 %v1779, %v1815
    %v1817 = vpop.f32.mrf.mxu0
    %v1818 = vadd.f32 %v1779, %v1817
    %1819 = vdwg.mxu0
    %1820 = vmatpush.bf16.msra.mxu0 0
    %1821 = vmatpush.bf16.msra.mxu0 0
    %1822 = vmatpush.bf16.msra.mxu0 0
    %1823 = vmatpush.bf16.msra.mxu0 0
    %1824 = vmatpush.bf16.msra.mxu0 0
    %1825 = vmatpush.bf16.msra.mxu0 0
    %1826 = vmatpush.bf16.msra.mxu0 %v1798
    %1827 = vmatpush.bf16.msra.mxu0 %v1796
    %1828 = vmatmul.bf16.gmra.mxu0 %v1804
    %v1829 = vpop.f32.mrf.mxu0
    %v1830 = vadd.f32 %v1780, %v1829
    %v1831 = vpop.f32.mrf.mxu0
    %v1832 = vadd.f32 %v1780, %v1831
    %1833 = vdwg.mxu0
    %v1834 = vxor.u32 %v1816, 2147483648
    %v1835 = vxor.u32 %v1818, 2147483648
    %v1836 = vmul.f32 %v1834, 1.442695
    %v1837 = vpow.pop %v1836
    %v1838 = vmul.f32 %v1835, 1.442695
    %v1839 = vpow.pop %v1838
    %v1840 = vadd.f32 %v1837, 1.0
    %v1841 = vadd.f32 %v1839, 1.0
    %v1842 = vrcp.pop %v1840
    %v1843 = vmul.f32 %v1840, %v1842
    %v1844 = vsub.f32 1.0, %v1843
    %v1845 = vmul.f32 %v1842, %v1844
    %v1846 = vadd.f32 %v1842, %v1845
    %vm1847 = vweird.f32 %v1840
    %vm1848 = vweird.f32 %v1842
    %vm1849 = vmor %vm1847, %vm1848
    %v1850 = vsel %vm1849, %v1842, %v1846
    %v1851 = vand.u32 2147483647, %v1840
    %vm1852 = vcmp.eq.f32.partialorder %v1851, 8.507059e+37
    %v1853 = vand.u32 %v1840, 2147483648
    %v1854 = vor.u32 1.1754944e-38, %v1853
    %v1855 = vsel %vm1852, %v1854, %v1850
    %v1856 = vmul.f32 1.0, %v1855
    %v1857 = vrcp.pop %v1841
    %v1858 = vmul.f32 %v1841, %v1857
    %v1859 = vsub.f32 1.0, %v1858
    %v1860 = vmul.f32 %v1857, %v1859
    %v1861 = vadd.f32 %v1857, %v1860
    %vm1862 = vweird.f32 %v1841
    %vm1863 = vweird.f32 %v1857
    %vm1864 = vmor %vm1862, %vm1863
    %v1865 = vsel %vm1864, %v1857, %v1861
    %v1866 = vand.u32 2147483647, %v1841
    %vm1867 = vcmp.eq.f32.partialorder %v1866, 8.507059e+37
    %v1868 = vand.u32 %v1841, 2147483648
    %v1869 = vor.u32 1.1754944e-38, %v1868
    %v1870 = vsel %vm1867, %v1869, %v1865
    %v1871 = vmul.f32 1.0, %v1870
    %v1872 = vmul.f32 %v1816, %v1856
    %v1873 = vmul.f32 %v1818, %v1871
    %v1874 = vmul.f32 %v1872, %v1830
    %v1875 = vmul.f32 %v1873, %v1832
    %v1876 = vpack.c.bf16 %v1875, %v1874
    %s1877 = scalar_lea.vmem %s14, 64
    %v1878 = vld [vmem:[%s1877] sm:$0xf]
    %v1879 = vld [vmem:[%s1877 + $0x4] sm:$0xf]
    %v1880 = vld [vmem:[%s1877 + $0x8] sm:$0xf]
    %v1881 = vld [vmem:[%s1877 + $0xc] sm:$0xf]
    %v1882 = vld [vmem:[%s1877 + $0x10] sm:$0xf]
    %v1883 = vld [vmem:[%s1877 + $0x14] sm:$0xf]
    %v1884 = vld [vmem:[%s1877 + $0x18] sm:$0xf]
    %v1885 = vld [vmem:[%s1877 + $0x1c] sm:$0xf]
    %v1886 = vld [vmem:[%s1877 + $0x20] sm:$0xf]
    %v1887 = vld [vmem:[%s1877 + $0x24] sm:$0xf]
    %v1888 = vld [vmem:[%s1877 + $0x28] sm:$0xf]
    %v1889 = vld [vmem:[%s1877 + $0x2c] sm:$0xf]
    %v1890 = vld [vmem:[%s1877 + $0x30] sm:$0xf]
    %v1891 = vld [vmem:[%s1877 + $0x34] sm:$0xf]
    %v1892 = vld [vmem:[%s1877 + $0x38] sm:$0xf]
    %v1893 = vld [vmem:[%s1877 + $0x3c] sm:$0xf]
    %v1910 = vunpack.c.l.b16 %v1878
    %v1911 = vunpack.c.l.b16 %v1879
    %v1912 = vunpack.c.l.b16 %v1880
    %v1913 = vunpack.c.l.b16 %v1881
    %v1914 = vunpack.c.l.b16 %v1882
    %v1915 = vunpack.c.l.b16 %v1883
    %v1916 = vunpack.c.l.b16 %v1884
    %v1917 = vunpack.c.l.b16 %v1885
    %v1918 = vunpack.c.l.b16 %v1886
    %v1919 = vunpack.c.l.b16 %v1887
    %v1920 = vunpack.c.l.b16 %v1888
    %v1921 = vunpack.c.l.b16 %v1889
    %v1922 = vunpack.c.l.b16 %v1890
    %v1923 = vunpack.c.l.b16 %v1891
    %v1924 = vunpack.c.l.b16 %v1892
    %v1925 = vunpack.c.l.b16 %v1893
    %v1926 = vpack.c.b16 %v1911, %v1910
    %v1927 = vpack.c.b16 %v1913, %v1912
    %v1928 = vpack.c.b16 %v1915, %v1914
    %v1929 = vpack.c.b16 %v1917, %v1916
    %v1930 = vpack.c.b16 %v1919, %v1918
    %v1931 = vpack.c.b16 %v1921, %v1920
    %v1932 = vpack.c.b16 %v1923, %v1922
    %v1933 = vpack.c.b16 %v1925, %v1924
    %1942 = vmatpush.bf16.msra.mxu0 %v1933
    %1943 = vmatpush.bf16.msra.mxu0 %v1932
    %1944 = vmatpush.bf16.msra.mxu0 %v1931
    %1945 = vmatpush.bf16.msra.mxu0 %v1930
    %1946 = vmatpush.bf16.msra.mxu0 %v1929
    %1947 = vmatpush.bf16.msra.mxu0 %v1928
    %1948 = vmatpush.bf16.msra.mxu0 %v1927
    %1949 = vmatpush.bf16.msra.mxu0 %v1926
    %1950 = vmatmul.bf16.gmra.mxu0 %v1876
    %v1951 = vpop.f32.mrf.mxu0
    %v1952 = vadd.f32 0.0, %v1951
    %v1953 = vpop.f32.mrf.mxu0
    %v1954 = vadd.f32 0.0, %v1953
    %1955 = vdwg.mxu0
    %v1956 = vadd.f32 %v1727, %v1952
    %v1957 = vadd.f32 %v1728, %v1954
    %s1958 = scalar_lea.vmem %s15, 1
    %v1959 = vld [vmem:[%s1958] sm:$0x1]
    %v1961 = vperm.slane %v1959, 0
    %v1963 = vadd.f32 %v1956, %v1961
    %v1964 = vadd.f32 %v1957, %v1961
    %v1965 = vld [vmem:[%s16] sm:$0x1]
    %v1966 = vmul.f32 %v1963, %v1963
    %v1967 = vmul.f32 %v1964, %v1964
    %v1968 = vsel %vm250, %v1966, 0.0
    %1969 = vadd.xlane.f32.xlu0 %v1968
    %v1970 = vpop.xlane.xlu0 %1969
    %v1971 = vsel %vm250, %v1967, 0.0
    %1972 = vadd.xlane.f32.xlu0 %v1971
    %v1973 = vpop.xlane.xlu0 %1972
    %v1974 = vmul.f32 %v1970, %v263
    %v1975 = vmul.f32 %v1973, %v263
    %v1976 = vadd.f32 %v1974, 1e-05
    %v1977 = vadd.f32 %v1975, 1e-05
    %v1978 = vrsqrt.pop %v1976
    %v1979 = vmul.f32 %v1978, %v1976
    %v1980 = vmul.f32 %v1979, %v1978
    %v1981 = vmul.f32 0.5, %v1980
    %v1982 = vsub.f32 1.5, %v1981
    %v1983 = vmul.f32 %v1978, %v1982
    %vm1984 = vweird.f32 %v1976
    %vm1985 = vweird.f32 %v1978
    %vm1986 = vmor %vm1984, %vm1985
    %v1987 = vsel %vm1986, %v1978, %v1983
    %v1988 = vrsqrt.pop %v1977
    %v1989 = vmul.f32 %v1988, %v1977
    %v1990 = vmul.f32 %v1989, %v1988
    %v1991 = vmul.f32 0.5, %v1990
    %v1992 = vsub.f32 1.5, %v1991
    %v1993 = vmul.f32 %v1988, %v1992
    %vm1994 = vweird.f32 %v1977
    %vm1995 = vweird.f32 %v1988
    %vm1996 = vmor %vm1994, %vm1995
    %v1997 = vsel %vm1996, %v1988, %v1993
    %v1998 = vmul.f32 %v1963, %v1987
    %v1999 = vmul.f32 %v1964, %v1997
    %v2001 = vperm.slane %v1965, 0
    %v2003 = vmul.f32 %v1998, %v2001
    %v2004 = vmul.f32 %v1999, %v2001
    %v2005 = vpack.c.bf16 %v2004, %v2003
    %v2006 = vld [vmem:[#allocation16] sm:$0xf]
    %v2007 = vld [vmem:[#allocation16 + $0x4] sm:$0xf]
    %v2008 = vld [vmem:[#allocation16 + $0x8] sm:$0xf]
    %v2009 = vld [vmem:[#allocation16 + $0xc] sm:$0xf]
    %v2010 = vld [vmem:[%s18] sm:$0x1]
    %v2012 = vperm.slane %v2010, 0
    %v2018 = vunpack.c.l.b16 %v2006
    %v2019 = vunpack.c.l.b16 %v2007
    %v2020 = vunpack.c.l.b16 %v2008
    %v2021 = vunpack.c.l.b16 %v2009
    %v2022 = vpack.c.b16 %v2019, %v2018
    %v2023 = vpack.c.b16 %v2021, %v2020
    %v2027 = vsel %vm250, %v2005, 0
    %2029 = vmatpush.bf16.msra.mxu0 0
    %2030 = vmatpush.bf16.msra.mxu0 0
    %2031 = vmatpush.bf16.msra.mxu0 0
    %2032 = vmatpush.bf16.msra.mxu0 0
    %2033 = vmatpush.bf16.msra.mxu0 0
    %2034 = vmatpush.bf16.msra.mxu0 0
    %2035 = vmatpush.bf16.msra.mxu0 %v2023
    %2036 = vmatpush.bf16.msra.mxu0 %v2022
    %2037 = vmatmul.bf16.gmra.mxu0 %v2027
    %v2038 = vpop.f32.mrf.mxu0
    %v2039 = vadd.f32 %v2012, %v2038
    %v2040 = vpop.f32.mrf.mxu0
    %v2041 = vadd.f32 %v2012, %v2040
    %2042 = vdwg.mxu0
    %2043 = vst [vmem:[#allocation17] sm:$0xff] %v2039
    %2044 = vst [vmem:[#allocation17 + $0x8] sm:$0xff] %v2041
    // Predicated region
    $region114: #{tpu_custom_call.1} parent=1 // pred_check
      _
    $region115: #{tpu_custom_call.1} parent=1 // pred_check_branch
      %2046 = sbr.rel (0) target = $region117
    $region116: #{tpu_custom_call.1} parent=1 // pred_region
      %2048 = vsyncadd [#allocation4], 0
      %s2049 = sshll.u32 [#allocation17], 4
      %s2050 = int_to_ptr.vmem [resolvable:$true] %s2049
      %s2051 = sshll.u32 %s19, 4
      %s2052 = int_to_ptr.hbm [resolvable:$true] %s2051
      %2057 = dma.vmem_to_hbm [thread:$0]  %s2050, 256, %s2052, [#allocation4], 128, 128, 8
    $region117: #{tpu_custom_call.1} parent=1 // pred_fallthru
      _
    // Predicated region
    $region118: #{tpu_custom_call.1} parent=1 // pred_check
      _
    $region119: #{tpu_custom_call.1} parent=1 // pred_check_branch
      %2059 = sbr.rel (0) target = $region121
    $region120: #{tpu_custom_call.1} parent=1 // pred_region
      %2061 = dma.done [#allocation4], 256
    $region121: #{tpu_custom_call.1} parent=1 // pred_fallthru
      _
    %2062 = vsyncpa [#allocation3], 1
    %2063 = vsyncpa [#allocation6], 1
    %2064 = vsyncpa [#allocation9], 1
    %2065 = vsyncpa [#allocation12], 1
    %2066 = vsyncpa [#allocation15], 1
    %2067 = vsyncpa [#allocation4], 1

</llo_original>
